<compile_context>
chip_gen: v7x
topology: tpu7x:2x2x1
jax: 0.10.0
libtpu: 0.0.40
codegen_flags: <defaults>
</compile_context>

<pallas_src>
import numpy as np
import jax
import jax.numpy as jnp
from jax.experimental import pallas as pl
from jax.experimental.pallas import tpu as pltpu


# ----------------------------- config (synthetic cfg) ------------------------
B = 2            # images
C = 4            # BACKBONE.OUT_CHANNELS
H = W = 16       # feature map spatial size
IMG = 64.0       # image size -> POOLER_SCALES = 16/64 = 0.25
SCALE = H / IMG
R = 4            # ROI_BOX_HEAD.POOLER_RESOLUTION
SR = 2           # ROI_BOX_HEAD.POOLER_SAMPLING_RATIO
D_IN = C * R * R           # input_size = OUT_CHANNELS * resolution**2 = 64
FEAT_DIM = 32              # cfg.CONFIG.feature_dim
P = 8                      # number of predicate classes
S = 10                     # GGNN state dim (GGNN(cfg, 10, 1, n_edge_types=1))
ROIS_PER_IMAGE = 3
N = B * ROIS_PER_IMAGE     # 6 object pairs total
NP = 8                     # N padded to a sublane multiple
HW = H * W
BHW = B * HW
RR = R * R
D_SP = 8                   # spatial (pair-box) feature dim
D_XS = D_IN + D_SP         # 72 = fused [appearance | spatial] input width

# bias-vector segment offsets (packed into one [1, 130] array)
_BO_HID, _BO_F, _BO_IN, _BO_MSG = 0, 64, 72, 82
_BO_Z, _BO_R, _BO_H, _BO_OUT, _B_TOT = 92, 102, 112, 122, 130


# ----------------------------- glue: ROIAlign interpolation matrix -----------
def build_roi_align_weights(boxes, img_off, spatial_scale, h, w, res, sr, n_img):
    """boxes [NP,4] (x1,y1,x2,y2) image coords, img_off [NP] image index ->
    bilinear interpolation matrix arranged sample-major: [res*res*NP, n_img*h*w]."""
    tot = n_img * h * w

    def per_roi(box, off):
        b = box * spatial_scale
        x1, y1, x2, y2 = b[0], b[1], b[2], b[3]
        roi_w = jnp.maximum(x2 - x1, 1.0)
        roi_h = jnp.maximum(y2 - y1, 1.0)
        bin_w = roi_w / res
        bin_h = roi_h / res
        pr = jnp.arange(res, dtype=jnp.float32)
        ps = jnp.arange(sr, dtype=jnp.float32)
        yy = (y1 + pr[:, None] * bin_h + (ps[None, :] + 0.5) * bin_h / sr).reshape(-1)
        xx = (x1 + pr[:, None] * bin_w + (ps[None, :] + 0.5) * bin_w / sr).reshape(-1)
        base = off * (h * w)

        def bilinear(y, x):
            y = jnp.clip(y, 0.0, h - 1.0)
            x = jnp.clip(x, 0.0, w - 1.0)
            y0 = jnp.floor(y)
            x0 = jnp.floor(x)
            y0i = y0.astype(jnp.int32)
            x0i = x0.astype(jnp.int32)
            y1i = jnp.minimum(y0i + 1, h - 1)
            x1i = jnp.minimum(x0i + 1, w - 1)
            ly = y - y0
            lx = x - x0
            hy = 1.0 - ly
            hx = 1.0 - lx

            def oh(yi, xi):
                return jax.nn.one_hot(base + yi * w + xi, tot, dtype=jnp.float32)

            return (hy * hx * oh(y0i, x0i) + hy * lx * oh(y0i, x1i)
                    + ly * hx * oh(y1i, x0i) + ly * lx * oh(y1i, x1i))

        wyx = jax.vmap(lambda y: jax.vmap(lambda x: bilinear(y, x))(xx))(yy)
        wyx = wyx.reshape(res, sr, res, sr, tot).mean(axis=(1, 3))
        return wyx.reshape(res * res, tot)

    w_roi = jax.vmap(per_roi)(boxes, img_off)                    # [NP, RR, tot]
    # sample-major rows: row p*NP + i  (keeps all in-kernel sublane slices 8-aligned)
    return w_roi.transpose(1, 0, 2).reshape(res * res * boxes.shape[0], tot)


# ------------------ fused Pallas kernel: pool + fusion + GGNN + softmax ------
def fused_kernel(wbig_ref, feat_ref, sp_ref, adj_ref,
                 w1_ref, w2_ref, wg_ref, bv_ref,
                 out_ref, xs_ref):
    def mm(a, b):
        return jnp.dot(a, b, preferred_element_type=jnp.float32)

    # 1) ROIAlign pooling for all ROIs as ONE MXU matmul: [RR*NP, BHW] @ [BHW, C]
    pooled = mm(wbig_ref[...], feat_ref[...])                    # [RR*NP, C]

    # 2) assemble fused fusion input [pooled (HWC flatten) | spatial] into scratch.
    #    Aligned static [NP, C] slices move the sample index from sublanes to lanes.
    for p in range(RR):                                          # static unroll (16)
        xs_ref[:, p * C:(p + 1) * C] = pooled[p * NP:(p + 1) * NP, :]
    xs_ref[:, D_IN:] = sp_ref[...]
    xs = xs_ref[...]                                             # [NP, D_XS]

    bv = bv_ref[...]                                             # [1, 130] packed biases

    # 3) multi_modal_fusion: blockdiag(appearance MLP, spatial MLP) -> ReLU -> logits
    hid = jnp.maximum(mm(xs, w1_ref[...]) + bv[:, _BO_HID:_BO_F], 0.0)   # [NP, 2F]
    out1 = mm(hid, w2_ref[...]) + bv[:, _BO_F:_BO_IN]                     # [NP, P]

    # 4) location_graph: GGNN, n_steps=1, n_edge_types=1, state_dim=S
    w_in = wg_ref[0:P, 0:S]          # [P, S]
    w_msg = wg_ref[:, 10:20]         # [S, S]
    w_zrh = wg_ref[:, 20:50]         # [S, 3S]  = [w_z | w_r | w_h]
    u_zr = wg_ref[:, 50:70]          # [S, 2S]  = [u_z | u_r]
    u_h = wg_ref[:, 70:80]           # [S, S]
    w_out = wg_ref[:, 80:88]         # [S, P]

    h = jnp.tanh(mm(out1, w_in) + bv[:, _BO_IN:_BO_MSG])                  # [NP, S]
    msg = mm(mm(adj_ref[...], h), w_msg) + bv[:, _BO_MSG:_BO_Z]           # [NP, S]
    gm = mm(msg, w_zrh)                                                   # [NP, 3S]
    gh = mm(h, u_zr)                                                      # [NP, 2S]
    z = jax.nn.sigmoid(gm[:, 0:S] + gh[:, 0:S] + bv[:, _BO_Z:_BO_R])
    r = jax.nn.sigmoid(gm[:, S:2 * S] + gh[:, S:2 * S] + bv[:, _BO_R:_BO_H])
    hh = jnp.tanh(gm[:, 2 * S:3 * S] + mm(r * h, u_h) + bv[:, _BO_H:_BO_OUT])
    h_new = (1.0 - z) * h + z * hh
    out2 = mm(h_new, w_out) + bv[:, _BO_OUT:_B_TOT]                       # [NP, P]

    # 5) output = softmax(output1 + output2, dim=1)
    logits = out1 + out2
    m = jnp.max(logits, axis=1, keepdims=True)
    e = jnp.exp(logits - m)
    out_ref[...] = e / jnp.sum(e, axis=1, keepdims=True)


def fused_call(w_big, featc, sp, adj, packed):
    vmem = pl.BlockSpec(memory_space=pltpu.MemorySpace.VMEM)
    args = (w_big, featc, sp, adj) + tuple(packed)
    return pl.pallas_call(
        fused_kernel,
        out_shape=jax.ShapeDtypeStruct((NP, P), jnp.float32),
        in_specs=[vmem] * len(args),
        out_specs=vmem,
        scratch_shapes=[pltpu.VMEM((NP, D_XS), jnp.float32)],
    )(*args)


# ----------------------------- parameter init + packing ----------------------
def kaiming_uniform(key, fan_in, shape):
    # nn.init.kaiming_uniform_(w, a=1): bound = sqrt(6 / ((1 + a^2) * fan_in))
    bound = float(np.sqrt(3.0 / fan_in))
    return jax.random.uniform(key, shape, jnp.float32, -bound, bound)


def init_params(key):
    """Parameters in the original (PyTorch) layout; biases init to 0."""
    ks = jax.random.split(key, 16)
    z = lambda d: jnp.zeros((d,), jnp.float32)
    return dict(
        w_app=kaiming_uniform(ks[0], D_IN, (D_IN, FEAT_DIM)), b_app=z(FEAT_DIM),
        w_sp=kaiming_uniform(ks[1], D_SP, (D_SP, FEAT_DIM)), b_sp=z(FEAT_DIM),
        w_fa=kaiming_uniform(ks[2], FEAT_DIM, (FEAT_DIM, P)),
        w_fs=kaiming_uniform(ks[3], FEAT_DIM, (FEAT_DIM, P)), b_f=z(P),
        w_in=kaiming_uniform(ks[4], P, (P, S)), b_in=z(S),
        w_msg=kaiming_uniform(ks[5], S, (S, S)), b_msg=z(S),
        w_z=kaiming_uniform(ks[6], S, (S, S)), u_z=kaiming_uniform(ks[7], S, (S, S)), b_z=z(S),
        w_r=kaiming_uniform(ks[8], S, (S, S)), u_r=kaiming_uniform(ks[9], S, (S, S)), b_r=z(S),
        w_h=kaiming_uniform(ks[10], S, (S, S)), u_h=kaiming_uniform(ks[11], S, (S, S)), b_h=z(S),
        w_out=kaiming_uniform(ks[12], S, (S, P)), b_out=z(P),
    )


def pack_params(p):
    """One-time host-side packing of the 23 tensors into 4 VMEM-friendly arrays."""
    # appearance rows permuted from PyTorch NCHW-flatten (c*RR+p) to the kernel's
    # HWC assembly order (p*C+c) -- pure re-indexing, identical math.
    perm = np.array([c * RR + q for q in range(RR) for c in range(C)], dtype=np.int32)
    w_app_hwc = p['w_app'][perm]                                         # [D_IN, F]

    w1 = jnp.zeros((D_XS, 2 * FEAT_DIM), jnp.float32)                    # blockdiag
    w1 = w1.at[:D_IN, :FEAT_DIM].set(w_app_hwc)
    w1 = w1.at[D_IN:, FEAT_DIM:].set(p['w_sp'])
    w2 = jnp.concatenate([p['w_fa'], p['w_fs']], axis=0)                 # [2F, P]

    wg = jnp.zeros((S, 88), jnp.float32)
    wg = wg.at[:P, 0:S].set(p['w_in'])
    wg = wg.at[:, 10:20].set(p['w_msg'])
    wg = wg.at[:, 20:50].set(jnp.concatenate([p['w_z'], p['w_r'], p['w_h']], axis=1))
    wg = wg.at[:, 50:70].set(jnp.concatenate([p['u_z'], p['u_r']], axis=1))
    wg = wg.at[:, 70:80].set(p['u_h'])
    wg = wg.at[:, 80:88].set(p['w_out'])

    bv = jnp.concatenate([p['b_app'], p['b_sp'], p['b_f'], p['b_in'], p['b_msg'],
                          p['b_z'], p['b_r'], p['b_h'], p['b_out']])[None, :]  # [1,130]
    return (w1, w2, wg, bv)


# ----------------------------- full forward (eval: predicate_detection) ------
@jax.jit
def predicate_model_forward(features, sub_boxes, obj_boxes, img_idx, packed):
    # union boxes of each (subject, object) pair -> pooler input
    union = jnp.concatenate(
        [jnp.minimum(sub_boxes[:, :2], obj_boxes[:, :2]),
         jnp.maximum(sub_boxes[:, 2:], obj_boxes[:, 2:])], axis=1)

    # pad N -> NP once (pad rows are discarded after the kernel)
    pad = NP - N
    union_p = jnp.concatenate([union, jnp.zeros((pad, 4), jnp.float32)], axis=0)
    idx_p = jnp.concatenate([img_idx, jnp.zeros((pad,), jnp.int32)], axis=0)
    idx_adj = jnp.concatenate([img_idx, -jnp.ones((pad,), jnp.int32)], axis=0)

    # feature_extractor: ROIAlign as a single interpolation-matrix matmul input
    w_big = build_roi_align_weights(union_p, idx_p, SCALE, H, W, R, SR, B)  # [RR*NP, BHW]

    # features NCHW -> channels-last [B*HW, C]; no per-ROI gather/duplication
    featc = features.transpose(0, 2, 3, 1).reshape(BHW, C)

    # spatial (location) features for the pair, padded
    sp = jnp.concatenate([sub_boxes / IMG, obj_boxes / IMG], axis=1)        # [N, 8]
    sp = jnp.concatenate([sp, jnp.zeros((pad, D_SP), jnp.float32)], axis=0)

    # graph adjacency: fully-connected within each image, row-normalized
    same = (idx_adj[:, None] == idx_adj[None, :]).astype(jnp.float32)
    adj = same * (1.0 - jnp.eye(NP, dtype=jnp.float32))
    adj = adj / jnp.maximum(adj.sum(axis=1, keepdims=True), 1.0)

    probs = fused_call(w_big, featc, sp, adj, packed)                       # [NP, P]
    return probs[:N]


if __name__ == "__main__":
    key = jax.random.PRNGKey(0)
    kf, kb1, kb2, kb3, kb4, kp = jax.random.split(key, 6)

    features = jax.random.normal(kf, (B, C, H, W), jnp.float32)             # NCHW

    # deterministic synthetic object-pair boxes (x1,y1,x2,y2) in image coords
    s_xy = jax.random.uniform(kb1, (N, 2), jnp.float32, 0.0, IMG / 2)
    s_wh = jax.random.uniform(kb2, (N, 2), jnp.float32, 8.0, IMG / 2)
    o_xy = jax.random.uniform(kb3, (N, 2), jnp.float32, 0.0, IMG / 2)
    o_wh = jax.random.uniform(kb4, (N, 2), jnp.float32, 8.0, IMG / 2)
    sub_boxes = jnp.concatenate([s_xy, jnp.minimum(s_xy + s_wh, IMG - 1.0)], axis=1)
    obj_boxes = jnp.concatenate([o_xy, jnp.minimum(o_xy + o_wh, IMG - 1.0)], axis=1)
    img_idx = jnp.repeat(jnp.arange(B, dtype=jnp.int32), ROIS_PER_IMAGE)

    params = init_params(kp)
    packed = pack_params(params)          # one-time weight packing (4 arrays)

    probs = predicate_model_forward(features, sub_boxes, obj_boxes, img_idx, packed)
    probs = jax.block_until_ready(probs)

    # output = output.split(boxes_per_image, dim=0)
    boxes_per_image = [ROIS_PER_IMAGE] * B
    splits = np.split(np.asarray(probs), np.cumsum(boxes_per_image)[:-1], axis=0)
    assert probs.shape == (N, P)
    assert all(np.allclose(s.sum(axis=1), 1.0, atol=1e-5) for s in splits)
    assert np.isfinite(np.asarray(probs)).all()

    print("KERNEL_OK")
</pallas_src>

<mosaic_0001>
module attributes {stable_mosaic.version = 11 : i64} {
  func.func @fused_kernel(%arg0: memref<128x512xf32, #tpu.memory_space<vmem>>, %arg1: memref<512x4xf32, #tpu.memory_space<vmem>>, %arg2: memref<8x8xf32, #tpu.memory_space<vmem>>, %arg3: memref<8x8xf32, #tpu.memory_space<vmem>>, %arg4: memref<72x64xf32, #tpu.memory_space<vmem>>, %arg5: memref<64x8xf32, #tpu.memory_space<vmem>>, %arg6: memref<10x88xf32, #tpu.memory_space<vmem>>, %arg7: memref<1x130xf32, #tpu.memory_space<vmem>>, %arg8: memref<8x8xf32, #tpu.memory_space<vmem>>, %arg9: memref<8x72xf32, #tpu.memory_space<vmem>>) attributes {dimension_semantics = [], scalar_prefetch = 0 : i64, scratch_operands = 1 : i64, tpu.core_type = #tpu.core_type<tc>} {
    %c0 = arith.constant 0 : index
    %c0_0 = arith.constant 0 : index
    %0 = vector.load %arg0[%c0, %c0_0] : memref<128x512xf32, #tpu.memory_space<vmem>>, vector<128x512xf32>
    %c0_1 = arith.constant 0 : index
    %c0_2 = arith.constant 0 : index
    %1 = vector.load %arg1[%c0_1, %c0_2] : memref<512x4xf32, #tpu.memory_space<vmem>>, vector<512x4xf32>
    %cst = arith.constant dense<0.000000e+00> : vector<128x4xf32>
    %2 = tpu.matmul %0, %1, %cst {dimension_numbers = #tpu.dot_dimension_numbers<[1], [0], [0], [1], [0, 0, 1, 1], [], []>} : vector<128x512xf32>, vector<512x4xf32>, vector<128x4xf32> -> vector<128x4xf32>
    %3 = vector.extract_strided_slice %2 {offsets = [0, 0], sizes = [8, 4], strides = [1, 1]} : vector<128x4xf32> to vector<8x4xf32>
    %c0_3 = arith.constant 0 : index
    %c0_4 = arith.constant 0 : index
    %4 = vector.load %arg9[%c0_3, %c0_4] : memref<8x72xf32, #tpu.memory_space<vmem>>, vector<8x4xf32>
    tpu.vector_store %arg9[%c0_3, %c0_4], %3 {strides = array<i32>} : memref<8x72xf32, #tpu.memory_space<vmem>>, vector<8x4xf32>,
    %5 = vector.extract_strided_slice %2 {offsets = [8, 0], sizes = [8, 4], strides = [1, 1]} : vector<128x4xf32> to vector<8x4xf32>
    %c0_5 = arith.constant 0 : index
    %c4 = arith.constant 4 : index
    %6 = vector.load %arg9[%c0_5, %c4] : memref<8x72xf32, #tpu.memory_space<vmem>>, vector<8x4xf32>
    tpu.vector_store %arg9[%c0_5, %c4], %5 {strides = array<i32>} : memref<8x72xf32, #tpu.memory_space<vmem>>, vector<8x4xf32>,
    %7 = vector.extract_strided_slice %2 {offsets = [16, 0], sizes = [8, 4], strides = [1, 1]} : vector<128x4xf32> to vector<8x4xf32>
    %c0_6 = arith.constant 0 : index
    %c8 = arith.constant 8 : index
    %8 = vector.load %arg9[%c0_6, %c8] : memref<8x72xf32, #tpu.memory_space<vmem>>, vector<8x4xf32>
    tpu.vector_store %arg9[%c0_6, %c8], %7 {strides = array<i32>} : memref<8x72xf32, #tpu.memory_space<vmem>>, vector<8x4xf32>,
    %9 = vector.extract_strided_slice %2 {offsets = [24, 0], sizes = [8, 4], strides = [1, 1]} : vector<128x4xf32> to vector<8x4xf32>
    %c0_7 = arith.constant 0 : index
    %c12 = arith.constant 12 : index
    %10 = vector.load %arg9[%c0_7, %c12] : memref<8x72xf32, #tpu.memory_space<vmem>>, vector<8x4xf32>
    tpu.vector_store %arg9[%c0_7, %c12], %9 {strides = array<i32>} : memref<8x72xf32, #tpu.memory_space<vmem>>, vector<8x4xf32>,
    %11 = vector.extract_strided_slice %2 {offsets = [32, 0], sizes = [8, 4], strides = [1, 1]} : vector<128x4xf32> to vector<8x4xf32>
    %c0_8 = arith.constant 0 : index
    %c16 = arith.constant 16 : index
    %12 = vector.load %arg9[%c0_8, %c16] : memref<8x72xf32, #tpu.memory_space<vmem>>, vector<8x4xf32>
    tpu.vector_store %arg9[%c0_8, %c16], %11 {strides = array<i32>} : memref<8x72xf32, #tpu.memory_space<vmem>>, vector<8x4xf32>,
    %13 = vector.extract_strided_slice %2 {offsets = [40, 0], sizes = [8, 4], strides = [1, 1]} : vector<128x4xf32> to vector<8x4xf32>
    %c0_9 = arith.constant 0 : index
    %c20 = arith.constant 20 : index
    %14 = vector.load %arg9[%c0_9, %c20] : memref<8x72xf32, #tpu.memory_space<vmem>>, vector<8x4xf32>
    tpu.vector_store %arg9[%c0_9, %c20], %13 {strides = array<i32>} : memref<8x72xf32, #tpu.memory_space<vmem>>, vector<8x4xf32>,
    %15 = vector.extract_strided_slice %2 {offsets = [48, 0], sizes = [8, 4], strides = [1, 1]} : vector<128x4xf32> to vector<8x4xf32>
    %c0_10 = arith.constant 0 : index
    %c24 = arith.constant 24 : index
    %16 = vector.load %arg9[%c0_10, %c24] : memref<8x72xf32, #tpu.memory_space<vmem>>, vector<8x4xf32>
    tpu.vector_store %arg9[%c0_10, %c24], %15 {strides = array<i32>} : memref<8x72xf32, #tpu.memory_space<vmem>>, vector<8x4xf32>,
    %17 = vector.extract_strided_slice %2 {offsets = [56, 0], sizes = [8, 4], strides = [1, 1]} : vector<128x4xf32> to vector<8x4xf32>
    %c0_11 = arith.constant 0 : index
    %c28 = arith.constant 28 : index
    %18 = vector.load %arg9[%c0_11, %c28] : memref<8x72xf32, #tpu.memory_space<vmem>>, vector<8x4xf32>
    tpu.vector_store %arg9[%c0_11, %c28], %17 {strides = array<i32>} : memref<8x72xf32, #tpu.memory_space<vmem>>, vector<8x4xf32>,
    %19 = vector.extract_strided_slice %2 {offsets = [64, 0], sizes = [8, 4], strides = [1, 1]} : vector<128x4xf32> to vector<8x4xf32>
    %c0_12 = arith.constant 0 : index
    %c32 = arith.constant 32 : index
    %20 = vector.load %arg9[%c0_12, %c32] : memref<8x72xf32, #tpu.memory_space<vmem>>, vector<8x4xf32>
    tpu.vector_store %arg9[%c0_12, %c32], %19 {strides = array<i32>} : memref<8x72xf32, #tpu.memory_space<vmem>>, vector<8x4xf32>,
    %21 = vector.extract_strided_slice %2 {offsets = [72, 0], sizes = [8, 4], strides = [1, 1]} : vector<128x4xf32> to vector<8x4xf32>
    %c0_13 = arith.constant 0 : index
    %c36 = arith.constant 36 : index
    %22 = vector.load %arg9[%c0_13, %c36] : memref<8x72xf32, #tpu.memory_space<vmem>>, vector<8x4xf32>
    tpu.vector_store %arg9[%c0_13, %c36], %21 {strides = array<i32>} : memref<8x72xf32, #tpu.memory_space<vmem>>, vector<8x4xf32>,
    %23 = vector.extract_strided_slice %2 {offsets = [80, 0], sizes = [8, 4], strides = [1, 1]} : vector<128x4xf32> to vector<8x4xf32>
    %c0_14 = arith.constant 0 : index
    %c40 = arith.constant 40 : index
    %24 = vector.load %arg9[%c0_14, %c40] : memref<8x72xf32, #tpu.memory_space<vmem>>, vector<8x4xf32>
    tpu.vector_store %arg9[%c0_14, %c40], %23 {strides = array<i32>} : memref<8x72xf32, #tpu.memory_space<vmem>>, vector<8x4xf32>,
    %25 = vector.extract_strided_slice %2 {offsets = [88, 0], sizes = [8, 4], strides = [1, 1]} : vector<128x4xf32> to vector<8x4xf32>
    %c0_15 = arith.constant 0 : index
    %c44 = arith.constant 44 : index
    %26 = vector.load %arg9[%c0_15, %c44] : memref<8x72xf32, #tpu.memory_space<vmem>>, vector<8x4xf32>
    tpu.vector_store %arg9[%c0_15, %c44], %25 {strides = array<i32>} : memref<8x72xf32, #tpu.memory_space<vmem>>, vector<8x4xf32>,
    %27 = vector.extract_strided_slice %2 {offsets = [96, 0], sizes = [8, 4], strides = [1, 1]} : vector<128x4xf32> to vector<8x4xf32>
    %c0_16 = arith.constant 0 : index
    %c48 = arith.constant 48 : index
    %28 = vector.load %arg9[%c0_16, %c48] : memref<8x72xf32, #tpu.memory_space<vmem>>, vector<8x4xf32>
    tpu.vector_store %arg9[%c0_16, %c48], %27 {strides = array<i32>} : memref<8x72xf32, #tpu.memory_space<vmem>>, vector<8x4xf32>,
    %29 = vector.extract_strided_slice %2 {offsets = [104, 0], sizes = [8, 4], strides = [1, 1]} : vector<128x4xf32> to vector<8x4xf32>
    %c0_17 = arith.constant 0 : index
    %c52 = arith.constant 52 : index
    %30 = vector.load %arg9[%c0_17, %c52] : memref<8x72xf32, #tpu.memory_space<vmem>>, vector<8x4xf32>
    tpu.vector_store %arg9[%c0_17, %c52], %29 {strides = array<i32>} : memref<8x72xf32, #tpu.memory_space<vmem>>, vector<8x4xf32>,
    %31 = vector.extract_strided_slice %2 {offsets = [112, 0], sizes = [8, 4], strides = [1, 1]} : vector<128x4xf32> to vector<8x4xf32>
    %c0_18 = arith.constant 0 : index
    %c56 = arith.constant 56 : index
    %32 = vector.load %arg9[%c0_18, %c56] : memref<8x72xf32, #tpu.memory_space<vmem>>, vector<8x4xf32>
    tpu.vector_store %arg9[%c0_18, %c56], %31 {strides = array<i32>} : memref<8x72xf32, #tpu.memory_space<vmem>>, vector<8x4xf32>,
    %33 = vector.extract_strided_slice %2 {offsets = [120, 0], sizes = [8, 4], strides = [1, 1]} : vector<128x4xf32> to vector<8x4xf32>
    %c0_19 = arith.constant 0 : index
    %c60 = arith.constant 60 : index
    %34 = vector.load %arg9[%c0_19, %c60] : memref<8x72xf32, #tpu.memory_space<vmem>>, vector<8x4xf32>
    tpu.vector_store %arg9[%c0_19, %c60], %33 {strides = array<i32>} : memref<8x72xf32, #tpu.memory_space<vmem>>, vector<8x4xf32>,
    %c0_20 = arith.constant 0 : index
    %c0_21 = arith.constant 0 : index
    %35 = vector.load %arg2[%c0_20, %c0_21] : memref<8x8xf32, #tpu.memory_space<vmem>>, vector<8x8xf32>
    %c0_22 = arith.constant 0 : index
    %c64 = arith.constant 64 : index
    %36 = vector.load %arg9[%c0_22, %c64] : memref<8x72xf32, #tpu.memory_space<vmem>>, vector<8x8xf32>
    tpu.vector_store %arg9[%c0_22, %c64], %35 {strides = array<i32>} : memref<8x72xf32, #tpu.memory_space<vmem>>, vector<8x8xf32>,
    %c0_23 = arith.constant 0 : index
    %c0_24 = arith.constant 0 : index
    %37 = vector.load %arg9[%c0_23, %c0_24] : memref<8x72xf32, #tpu.memory_space<vmem>>, vector<8x72xf32>
    %c0_25 = arith.constant 0 : index
    %c0_26 = arith.constant 0 : index
    %38 = vector.load %arg7[%c0_25, %c0_26] : memref<1x130xf32, #tpu.memory_space<vmem>>, vector<1x130xf32>
    %c0_27 = arith.constant 0 : index
    %c0_28 = arith.constant 0 : index
    %39 = vector.load %arg4[%c0_27, %c0_28] : memref<72x64xf32, #tpu.memory_space<vmem>>, vector<72x64xf32>
    %cst_29 = arith.constant dense<0.000000e+00> : vector<8x64xf32>
    %40 = tpu.matmul %37, %39, %cst_29 {dimension_numbers = #tpu.dot_dimension_numbers<[1], [0], [0], [1], [0, 0, 1, 1], [], []>} : vector<8x72xf32>, vector<72x64xf32>, vector<8x64xf32> -> vector<8x64xf32>
    %41 = vector.extract_strided_slice %38 {offsets = [0, 0], sizes = [1, 64], strides = [1, 1]} : vector<1x130xf32> to vector<1x64xf32>
    %42 = vector.broadcast %41 : vector<1x64xf32> to vector<8x64xf32>
    %43 = arith.addf %40, %42 : vector<8x64xf32>
    %cst_30 = arith.constant 0.000000e+00 : f32
    %44 = vector.broadcast %cst_30 : f32 to vector<8x64xf32>
    %45 = arith.maximumf %43, %44 : vector<8x64xf32>
    %c0_31 = arith.constant 0 : index
    %c0_32 = arith.constant 0 : index
    %46 = vector.load %arg5[%c0_31, %c0_32] : memref<64x8xf32, #tpu.memory_space<vmem>>, vector<64x8xf32>
    %cst_33 = arith.constant dense<0.000000e+00> : vector<8x8xf32>
    %47 = tpu.matmul %45, %46, %cst_33 {dimension_numbers = #tpu.dot_dimension_numbers<[1], [0], [0], [1], [0, 0, 1, 1], [], []>} : vector<8x64xf32>, vector<64x8xf32>, vector<8x8xf32> -> vector<8x8xf32>
    %48 = vector.extract_strided_slice %38 {offsets = [0, 64], sizes = [1, 8], strides = [1, 1]} : vector<1x130xf32> to vector<1x8xf32>
    %49 = vector.broadcast %48 : vector<1x8xf32> to vector<8x8xf32>
    %50 = arith.addf %47, %49 : vector<8x8xf32>
    %c0_34 = arith.constant 0 : index
    %c0_35 = arith.constant 0 : index
    %51 = vector.load %arg6[%c0_34, %c0_35] : memref<10x88xf32, #tpu.memory_space<vmem>>, vector<8x10xf32>
    %c0_36 = arith.constant 0 : index
    %c10 = arith.constant 10 : index
    %52 = vector.load %arg6[%c0_36, %c10] : memref<10x88xf32, #tpu.memory_space<vmem>>, vector<10x10xf32>
    %c0_37 = arith.constant 0 : index
    %c20_38 = arith.constant 20 : index
    %53 = vector.load %arg6[%c0_37, %c20_38] : memref<10x88xf32, #tpu.memory_space<vmem>>, vector<10x30xf32>
    %c0_39 = arith.constant 0 : index
    %c50 = arith.constant 50 : index
    %54 = vector.load %arg6[%c0_39, %c50] : memref<10x88xf32, #tpu.memory_space<vmem>>, vector<10x20xf32>
    %c0_40 = arith.constant 0 : index
    %c70 = arith.constant 70 : index
    %55 = vector.load %arg6[%c0_40, %c70] : memref<10x88xf32, #tpu.memory_space<vmem>>, vector<10x10xf32>
    %c0_41 = arith.constant 0 : index
    %c80 = arith.constant 80 : index
    %56 = vector.load %arg6[%c0_41, %c80] : memref<10x88xf32, #tpu.memory_space<vmem>>, vector<10x8xf32>
    %cst_42 = arith.constant dense<0.000000e+00> : vector<8x10xf32>
    %57 = tpu.matmul %50, %51, %cst_42 {dimension_numbers = #tpu.dot_dimension_numbers<[1], [0], [0], [1], [0, 0, 1, 1], [], []>} : vector<8x8xf32>, vector<8x10xf32>, vector<8x10xf32> -> vector<8x10xf32>
    %58 = vector.extract_strided_slice %38 {offsets = [0, 72], sizes = [1, 10], strides = [1, 1]} : vector<1x130xf32> to vector<1x10xf32>
    %59 = vector.broadcast %58 : vector<1x10xf32> to vector<8x10xf32>
    %60 = arith.addf %57, %59 : vector<8x10xf32>
    %61 = math.tanh %60 : vector<8x10xf32>
    %c0_43 = arith.constant 0 : index
    %c0_44 = arith.constant 0 : index
    %62 = vector.load %arg3[%c0_43, %c0_44] : memref<8x8xf32, #tpu.memory_space<vmem>>, vector<8x8xf32>
    %cst_45 = arith.constant dense<0.000000e+00> : vector<8x10xf32>
    %63 = tpu.matmul %62, %61, %cst_45 {dimension_numbers = #tpu.dot_dimension_numbers<[1], [0], [0], [1], [0, 0, 1, 1], [], []>} : vector<8x8xf32>, vector<8x10xf32>, vector<8x10xf32> -> vector<8x10xf32>
    %cst_46 = arith.constant dense<0.000000e+00> : vector<8x10xf32>
    %64 = tpu.matmul %63, %52, %cst_46 {dimension_numbers = #tpu.dot_dimension_numbers<[1], [0], [0], [1], [0, 0, 1, 1], [], []>} : vector<8x10xf32>, vector<10x10xf32>, vector<8x10xf32> -> vector<8x10xf32>
    %65 = vector.extract_strided_slice %38 {offsets = [0, 82], sizes = [1, 10], strides = [1, 1]} : vector<1x130xf32> to vector<1x10xf32>
    %66 = vector.broadcast %65 : vector<1x10xf32> to vector<8x10xf32>
    %67 = arith.addf %64, %66 : vector<8x10xf32>
    %cst_47 = arith.constant dense<0.000000e+00> : vector<8x30xf32>
    %68 = tpu.matmul %67, %53, %cst_47 {dimension_numbers = #tpu.dot_dimension_numbers<[1], [0], [0], [1], [0, 0, 1, 1], [], []>} : vector<8x10xf32>, vector<10x30xf32>, vector<8x30xf32> -> vector<8x30xf32>
    %cst_48 = arith.constant dense<0.000000e+00> : vector<8x20xf32>
    %69 = tpu.matmul %61, %54, %cst_48 {dimension_numbers = #tpu.dot_dimension_numbers<[1], [0], [0], [1], [0, 0, 1, 1], [], []>} : vector<8x10xf32>, vector<10x20xf32>, vector<8x20xf32> -> vector<8x20xf32>
    %70 = vector.extract_strided_slice %68 {offsets = [0, 0], sizes = [8, 10], strides = [1, 1]} : vector<8x30xf32> to vector<8x10xf32>
    %71 = vector.extract_strided_slice %69 {offsets = [0, 0], sizes = [8, 10], strides = [1, 1]} : vector<8x20xf32> to vector<8x10xf32>
    %72 = arith.addf %70, %71 : vector<8x10xf32>
    %73 = vector.extract_strided_slice %38 {offsets = [0, 92], sizes = [1, 10], strides = [1, 1]} : vector<1x130xf32> to vector<1x10xf32>
    %74 = vector.broadcast %73 : vector<1x10xf32> to vector<8x10xf32>
    %75 = arith.addf %72, %74 : vector<8x10xf32>
    %76 = arith.negf %75 : vector<8x10xf32>
    %77 = math.exp %76 : vector<8x10xf32>
    %cst_49 = arith.constant 1.000000e+00 : f32
    %78 = vector.broadcast %cst_49 : f32 to vector<8x10xf32>
    %79 = arith.addf %78, %77 : vector<8x10xf32>
    %80 = arith.divf %78, %79 : vector<8x10xf32>
    %81 = vector.extract_strided_slice %68 {offsets = [0, 10], sizes = [8, 10], strides = [1, 1]} : vector<8x30xf32> to vector<8x10xf32>
    %82 = vector.extract_strided_slice %69 {offsets = [0, 10], sizes = [8, 10], strides = [1, 1]} : vector<8x20xf32> to vector<8x10xf32>
    %83 = arith.addf %81, %82 : vector<8x10xf32>
    %84 = vector.extract_strided_slice %38 {offsets = [0, 102], sizes = [1, 10], strides = [1, 1]} : vector<1x130xf32> to vector<1x10xf32>
    %85 = vector.broadcast %84 : vector<1x10xf32> to vector<8x10xf32>
    %86 = arith.addf %83, %85 : vector<8x10xf32>
    %87 = arith.negf %86 : vector<8x10xf32>
    %88 = math.exp %87 : vector<8x10xf32>
    %cst_50 = arith.constant 1.000000e+00 : f32
    %89 = vector.broadcast %cst_50 : f32 to vector<8x10xf32>
    %90 = arith.addf %89, %88 : vector<8x10xf32>
    %91 = arith.divf %89, %90 : vector<8x10xf32>
    %92 = vector.extract_strided_slice %68 {offsets = [0, 20], sizes = [8, 10], strides = [1, 1]} : vector<8x30xf32> to vector<8x10xf32>
    %93 = arith.mulf %91, %61 : vector<8x10xf32>
    %cst_51 = arith.constant dense<0.000000e+00> : vector<8x10xf32>
    %94 = tpu.matmul %93, %55, %cst_51 {dimension_numbers = #tpu.dot_dimension_numbers<[1], [0], [0], [1], [0, 0, 1, 1], [], []>} : vector<8x10xf32>, vector<10x10xf32>, vector<8x10xf32> -> vector<8x10xf32>
    %95 = arith.addf %92, %94 : vector<8x10xf32>
    %96 = vector.extract_strided_slice %38 {offsets = [0, 112], sizes = [1, 10], strides = [1, 1]} : vector<1x130xf32> to vector<1x10xf32>
    %97 = vector.broadcast %96 : vector<1x10xf32> to vector<8x10xf32>
    %98 = arith.addf %95, %97 : vector<8x10xf32>
    %99 = math.tanh %98 : vector<8x10xf32>
    %cst_52 = arith.constant 1.000000e+00 : f32
    %100 = vector.broadcast %cst_52 : f32 to vector<8x10xf32>
    %101 = arith.subf %100, %80 : vector<8x10xf32>
    %102 = arith.mulf %101, %61 : vector<8x10xf32>
    %103 = arith.mulf %80, %99 : vector<8x10xf32>
    %104 = arith.addf %102, %103 : vector<8x10xf32>
    %cst_53 = arith.constant dense<0.000000e+00> : vector<8x8xf32>
    %105 = tpu.matmul %104, %56, %cst_53 {dimension_numbers = #tpu.dot_dimension_numbers<[1], [0], [0], [1], [0, 0, 1, 1], [], []>} : vector<8x10xf32>, vector<10x8xf32>, vector<8x8xf32> -> vector<8x8xf32>
    %106 = vector.extract_strided_slice %38 {offsets = [0, 122], sizes = [1, 8], strides = [1, 1]} : vector<1x130xf32> to vector<1x8xf32>
    %107 = vector.broadcast %106 : vector<1x8xf32> to vector<8x8xf32>
    %108 = arith.addf %105, %107 : vector<8x8xf32>
    %109 = arith.addf %50, %108 : vector<8x8xf32>
    %cst_54 = arith.constant dense<0xFF800000> : vector<8xf32>
    %110 = vector.multi_reduction <maximumf>, %109, %cst_54 [1] : vector<8x8xf32> to vector<8xf32>
    %111 = vector.shape_cast %110 : vector<8xf32> to vector<8x1xf32>
    %112 = vector.broadcast %111 : vector<8x1xf32> to vector<8x8xf32>
    %113 = arith.subf %109, %112 : vector<8x8xf32>
    %114 = math.exp %113 : vector<8x8xf32>
    %cst_55 = arith.constant dense<0.000000e+00> : vector<8xf32>
    %115 = vector.multi_reduction <add>, %114, %cst_55 [1] : vector<8x8xf32> to vector<8xf32>
    %116 = vector.shape_cast %115 : vector<8xf32> to vector<8x1xf32>
    %117 = vector.broadcast %116 : vector<8x1xf32> to vector<8x8xf32>
    %118 = arith.divf %114, %117 : vector<8x8xf32>
    %c0_56 = arith.constant 0 : index
    %c0_57 = arith.constant 0 : index
    %119 = vector.load %arg8[%c0_56, %c0_57] : memref<8x8xf32, #tpu.memory_space<vmem>>, vector<8x8xf32>
    tpu.vector_store %arg8[%c0_56, %c0_57], %118 {strides = array<i32>} : memref<8x8xf32, #tpu.memory_space<vmem>>, vector<8x8xf32>,
    return
  }
}

</mosaic_0001>

<llo_original>
// kernel: predicate_model_forward.1
$region0: #{predicate_model_forward.1}
  #allocation0 [shape = 'u32[]', space=smem, size = 0x4, offset = 0x4, fixed_abs, tag = 'smem constant byte address 0x4 - core index']
  #allocation1 [shape = 'u32[144,128]{1,0:T(1,128)}', space=vmem, size = 0x12000, scoped, tag = 'internal scratch']
  #allocation2 [shape = 'f32[8,72]{1,0:T(8,128)}', space=vmem, size = 0x1000, scoped, tag = 'scratch operand']
  %s0 = inlined_call_operand.vmem [shape: f32[128,512], index: 0, kind: input, shape index: {}]
  %s1 = inlined_call_operand.vmem [shape: f32[512,4], index: 1, kind: input, shape index: {}]
  %s2 = inlined_call_operand.vmem [shape: f32[8,8], index: 2, kind: input, shape index: {}]
  %s3 = inlined_call_operand.vmem [shape: f32[8,8], index: 3, kind: input, shape index: {}]
  %s4 = inlined_call_operand.vmem [shape: f32[72,64], index: 4, kind: input, shape index: {}]
  %s5 = inlined_call_operand.vmem [shape: f32[64,8], index: 5, kind: input, shape index: {}]
  %s6 = inlined_call_operand.vmem [shape: f32[10,88], index: 6, kind: input, shape index: {}]
  %s7 = inlined_call_operand.vmem [shape: f32[1,130], index: 7, kind: input, shape index: {}]
  %s8 = inlined_call_operand.hbm [shape: f32[8,8], index: 8, kind: output, shape index: {}]
  %s9 = sld [smem:[#allocation0]]
  $region42: #{predicate_model_forward.1} parent=0
    _
  %s11 = ssub.s32 1, %s9
  %s12 = scalar_select 0, %s11, %s9
  $region1: #{predicate_model_forward.1} parent=0
    #allocation3 [shape = 'u8[4096]{0}', space=vmem, size = 0x1000, scoped, tag = 'output window, operand 0, single buffered']
    #allocation4 [shape = 's32[1]{0}', space=sflag, size = 0x4, scoped, tag = 'scoped memory for predicate_model_forward.1']
    %13 = vsyncpa [#allocation4], 0
    // Predicated region
    $region2: #{predicate_model_forward.1} parent=1 // pred_check
      _
    $region3: #{predicate_model_forward.1} parent=1 // pred_check_branch
      %15 = sbr.rel (0) target = $region5
    $region4: #{predicate_model_forward.1} parent=1 // pred_region
      _
    $region5: #{predicate_model_forward.1} parent=1 // pred_fallthru
      _
    // Predicated region
    $region6: #{predicate_model_forward.1} parent=1 // pred_check
      _
    $region7: #{predicate_model_forward.1} parent=1 // pred_check_branch
      %17 = sbr.rel (0) target = $region9
    $region8: #{predicate_model_forward.1} parent=1 // pred_region
      _
    $region9: #{predicate_model_forward.1} parent=1 // pred_fallthru
      _
    // Predicated region
    $region10: #{predicate_model_forward.1} parent=1 // pred_check
      _
    $region11: #{predicate_model_forward.1} parent=1 // pred_check_branch
      %19 = sbr.rel (0) target = $region13
    $region12: #{predicate_model_forward.1} parent=1 // pred_region
      _
    $region13: #{predicate_model_forward.1} parent=1 // pred_fallthru
      _
    // Predicated region
    $region14: #{predicate_model_forward.1} parent=1 // pred_check
      _
    $region15: #{predicate_model_forward.1} parent=1 // pred_check_branch
      %21 = sbr.rel (0) target = $region17
    $region16: #{predicate_model_forward.1} parent=1 // pred_region
      _
    $region17: #{predicate_model_forward.1} parent=1 // pred_fallthru
      _
    // Predicated region
    $region18: #{predicate_model_forward.1} parent=1 // pred_check
      _
    $region19: #{predicate_model_forward.1} parent=1 // pred_check_branch
      %23 = sbr.rel (0) target = $region21
    $region20: #{predicate_model_forward.1} parent=1 // pred_region
      _
    $region21: #{predicate_model_forward.1} parent=1 // pred_fallthru
      _
    // Predicated region
    $region22: #{predicate_model_forward.1} parent=1 // pred_check
      _
    $region23: #{predicate_model_forward.1} parent=1 // pred_check_branch
      %25 = sbr.rel (0) target = $region25
    $region24: #{predicate_model_forward.1} parent=1 // pred_region
      _
    $region25: #{predicate_model_forward.1} parent=1 // pred_fallthru
      _
    // Predicated region
    $region26: #{predicate_model_forward.1} parent=1 // pred_check
      _
    $region27: #{predicate_model_forward.1} parent=1 // pred_check_branch
      %27 = sbr.rel (0) target = $region29
    $region28: #{predicate_model_forward.1} parent=1 // pred_region
      _
    $region29: #{predicate_model_forward.1} parent=1 // pred_fallthru
      _
    // Predicated region
    $region30: #{predicate_model_forward.1} parent=1 // pred_check
      _
    $region31: #{predicate_model_forward.1} parent=1 // pred_check_branch
      %29 = sbr.rel (0) target = $region33
    $region32: #{predicate_model_forward.1} parent=1 // pred_region
      _
    $region33: #{predicate_model_forward.1} parent=1 // pred_fallthru
      _
    %v30 = vld [vmem:[%s0] sm:$0xff]
    %v31 = vld [vmem:[%s0 + $0x8] sm:$0xff]
    %v32 = vld [vmem:[%s0 + $0x10] sm:$0xff]
    %v33 = vld [vmem:[%s0 + $0x18] sm:$0xff]
    %v34 = vld [vmem:[%s0 + $0x20] sm:$0xff]
    %v35 = vld [vmem:[%s0 + $0x28] sm:$0xff]
    %v36 = vld [vmem:[%s0 + $0x30] sm:$0xff]
    %v37 = vld [vmem:[%s0 + $0x38] sm:$0xff]
    %v38 = vld [vmem:[%s0 + $0x40] sm:$0xff]
    %v39 = vld [vmem:[%s0 + $0x48] sm:$0xff]
    %v40 = vld [vmem:[%s0 + $0x50] sm:$0xff]
    %v41 = vld [vmem:[%s0 + $0x58] sm:$0xff]
    %v42 = vld [vmem:[%s0 + $0x60] sm:$0xff]
    %v43 = vld [vmem:[%s0 + $0x68] sm:$0xff]
    %v44 = vld [vmem:[%s0 + $0x70] sm:$0xff]
    %v45 = vld [vmem:[%s0 + $0x78] sm:$0xff]
    %v46 = vld [vmem:[%s0 + $0x80] sm:$0xff]
    %v47 = vld [vmem:[%s0 + $0x88] sm:$0xff]
    %v48 = vld [vmem:[%s0 + $0x90] sm:$0xff]
    %v49 = vld [vmem:[%s0 + $0x98] sm:$0xff]
    %v50 = vld [vmem:[%s0 + $0xa0] sm:$0xff]
    %v51 = vld [vmem:[%s0 + $0xa8] sm:$0xff]
    %v52 = vld [vmem:[%s0 + $0xb0] sm:$0xff]
    %v53 = vld [vmem:[%s0 + $0xb8] sm:$0xff]
    %v54 = vld [vmem:[%s0 + $0xc0] sm:$0xff]
    %v55 = vld [vmem:[%s0 + $0xc8] sm:$0xff]
    %v56 = vld [vmem:[%s0 + $0xd0] sm:$0xff]
    %v57 = vld [vmem:[%s0 + $0xd8] sm:$0xff]
    %v58 = vld [vmem:[%s0 + $0xe0] sm:$0xff]
    %v59 = vld [vmem:[%s0 + $0xe8] sm:$0xff]
    %v60 = vld [vmem:[%s0 + $0xf0] sm:$0xff]
    %v61 = vld [vmem:[%s0 + $0xf8] sm:$0xff]
    %v62 = vld [vmem:[%s0 + $0x100] sm:$0xff]
    %v63 = vld [vmem:[%s0 + $0x108] sm:$0xff]
    %v64 = vld [vmem:[%s0 + $0x110] sm:$0xff]
    %v65 = vld [vmem:[%s0 + $0x118] sm:$0xff]
    %v66 = vld [vmem:[%s0 + $0x120] sm:$0xff]
    %v67 = vld [vmem:[%s0 + $0x128] sm:$0xff]
    %v68 = vld [vmem:[%s0 + $0x130] sm:$0xff]
    %v69 = vld [vmem:[%s0 + $0x138] sm:$0xff]
    %v70 = vld [vmem:[%s0 + $0x140] sm:$0xff]
    %v71 = vld [vmem:[%s0 + $0x148] sm:$0xff]
    %v72 = vld [vmem:[%s0 + $0x150] sm:$0xff]
    %v73 = vld [vmem:[%s0 + $0x158] sm:$0xff]
    %v74 = vld [vmem:[%s0 + $0x160] sm:$0xff]
    %v75 = vld [vmem:[%s0 + $0x168] sm:$0xff]
    %v76 = vld [vmem:[%s0 + $0x170] sm:$0xff]
    %v77 = vld [vmem:[%s0 + $0x178] sm:$0xff]
    %v78 = vld [vmem:[%s0 + $0x180] sm:$0xff]
    %v79 = vld [vmem:[%s0 + $0x188] sm:$0xff]
    %v80 = vld [vmem:[%s0 + $0x190] sm:$0xff]
    %v81 = vld [vmem:[%s0 + $0x198] sm:$0xff]
    %v82 = vld [vmem:[%s0 + $0x1a0] sm:$0xff]
    %v83 = vld [vmem:[%s0 + $0x1a8] sm:$0xff]
    %v84 = vld [vmem:[%s0 + $0x1b0] sm:$0xff]
    %v85 = vld [vmem:[%s0 + $0x1b8] sm:$0xff]
    %v86 = vld [vmem:[%s0 + $0x1c0] sm:$0xff]
    %v87 = vld [vmem:[%s0 + $0x1c8] sm:$0xff]
    %v88 = vld [vmem:[%s0 + $0x1d0] sm:$0xff]
    %v89 = vld [vmem:[%s0 + $0x1d8] sm:$0xff]
    %v90 = vld [vmem:[%s0 + $0x1e0] sm:$0xff]
    %v91 = vld [vmem:[%s0 + $0x1e8] sm:$0xff]
    %v92 = vld [vmem:[%s0 + $0x1f0] sm:$0xff]
    %v93 = vld [vmem:[%s0 + $0x1f8] sm:$0xff]
    %v94 = vld [vmem:[%s1] sm:$0xff]
    %v95 = vld [vmem:[%s1 + $0x8] sm:$0xff]
    %v96 = vld [vmem:[%s1 + $0x10] sm:$0xff]
    %v97 = vld [vmem:[%s1 + $0x18] sm:$0xff]
    %v98 = vld [vmem:[%s1 + $0x20] sm:$0xff]
    %v99 = vld [vmem:[%s1 + $0x28] sm:$0xff]
    %v100 = vld [vmem:[%s1 + $0x30] sm:$0xff]
    %v101 = vld [vmem:[%s1 + $0x38] sm:$0xff]
    %v102 = vld [vmem:[%s1 + $0x40] sm:$0xff]
    %v103 = vld [vmem:[%s1 + $0x48] sm:$0xff]
    %v104 = vld [vmem:[%s1 + $0x50] sm:$0xff]
    %v105 = vld [vmem:[%s1 + $0x58] sm:$0xff]
    %v106 = vld [vmem:[%s1 + $0x60] sm:$0xff]
    %v107 = vld [vmem:[%s1 + $0x68] sm:$0xff]
    %v108 = vld [vmem:[%s1 + $0x70] sm:$0xff]
    %v109 = vld [vmem:[%s1 + $0x78] sm:$0xff]
    %v110 = vld [vmem:[%s1 + $0x80] sm:$0xff]
    %v111 = vld [vmem:[%s1 + $0x88] sm:$0xff]
    %v112 = vld [vmem:[%s1 + $0x90] sm:$0xff]
    %v113 = vld [vmem:[%s1 + $0x98] sm:$0xff]
    %v114 = vld [vmem:[%s1 + $0xa0] sm:$0xff]
    %v115 = vld [vmem:[%s1 + $0xa8] sm:$0xff]
    %v116 = vld [vmem:[%s1 + $0xb0] sm:$0xff]
    %v117 = vld [vmem:[%s1 + $0xb8] sm:$0xff]
    %v118 = vld [vmem:[%s1 + $0xc0] sm:$0xff]
    %v119 = vld [vmem:[%s1 + $0xc8] sm:$0xff]
    %v120 = vld [vmem:[%s1 + $0xd0] sm:$0xff]
    %v121 = vld [vmem:[%s1 + $0xd8] sm:$0xff]
    %v122 = vld [vmem:[%s1 + $0xe0] sm:$0xff]
    %v123 = vld [vmem:[%s1 + $0xe8] sm:$0xff]
    %v124 = vld [vmem:[%s1 + $0xf0] sm:$0xff]
    %v125 = vld [vmem:[%s1 + $0xf8] sm:$0xff]
    %v126 = vld [vmem:[%s1 + $0x100] sm:$0xff]
    %v127 = vld [vmem:[%s1 + $0x108] sm:$0xff]
    %v128 = vld [vmem:[%s1 + $0x110] sm:$0xff]
    %v129 = vld [vmem:[%s1 + $0x118] sm:$0xff]
    %v130 = vld [vmem:[%s1 + $0x120] sm:$0xff]
    %v131 = vld [vmem:[%s1 + $0x128] sm:$0xff]
    %v132 = vld [vmem:[%s1 + $0x130] sm:$0xff]
    %v133 = vld [vmem:[%s1 + $0x138] sm:$0xff]
    %v134 = vld [vmem:[%s1 + $0x140] sm:$0xff]
    %v135 = vld [vmem:[%s1 + $0x148] sm:$0xff]
    %v136 = vld [vmem:[%s1 + $0x150] sm:$0xff]
    %v137 = vld [vmem:[%s1 + $0x158] sm:$0xff]
    %v138 = vld [vmem:[%s1 + $0x160] sm:$0xff]
    %v139 = vld [vmem:[%s1 + $0x168] sm:$0xff]
    %v140 = vld [vmem:[%s1 + $0x170] sm:$0xff]
    %v141 = vld [vmem:[%s1 + $0x178] sm:$0xff]
    %v142 = vld [vmem:[%s1 + $0x180] sm:$0xff]
    %v143 = vld [vmem:[%s1 + $0x188] sm:$0xff]
    %v144 = vld [vmem:[%s1 + $0x190] sm:$0xff]
    %v145 = vld [vmem:[%s1 + $0x198] sm:$0xff]
    %v146 = vld [vmem:[%s1 + $0x1a0] sm:$0xff]
    %v147 = vld [vmem:[%s1 + $0x1a8] sm:$0xff]
    %v148 = vld [vmem:[%s1 + $0x1b0] sm:$0xff]
    %v149 = vld [vmem:[%s1 + $0x1b8] sm:$0xff]
    %v150 = vld [vmem:[%s1 + $0x1c0] sm:$0xff]
    %v151 = vld [vmem:[%s1 + $0x1c8] sm:$0xff]
    %v152 = vld [vmem:[%s1 + $0x1d0] sm:$0xff]
    %v153 = vld [vmem:[%s1 + $0x1d8] sm:$0xff]
    %v154 = vld [vmem:[%s1 + $0x1e0] sm:$0xff]
    %v155 = vld [vmem:[%s1 + $0x1e8] sm:$0xff]
    %v156 = vld [vmem:[%s1 + $0x1f0] sm:$0xff]
    %v157 = vld [vmem:[%s1 + $0x1f8] sm:$0xff]
    %158 = vmatprep.subr.mxu0 0.0
    %159 = vmatpush1.msra.mxu0 %v94
    %160 = vmatprep.subr.mxu0 0.0
    %161 = vmatpush1.msra.mxu0 %v95
    %162 = vmatprep.subr.mxu0 0.0
    %163 = vmatpush1.msra.mxu0 %v96
    %164 = vmatprep.subr.mxu0 0.0
    %165 = vmatpush1.msra.mxu0 %v97
    %166 = vmatprep.subr.mxu0 0.0
    %167 = vmatpush1.msra.mxu0 %v98
    %168 = vmatprep.subr.mxu0 0.0
    %169 = vmatpush1.msra.mxu0 %v99
    %170 = vmatprep.subr.mxu0 0.0
    %171 = vmatpush1.msra.mxu0 %v100
    %172 = vmatprep.subr.mxu0 0.0
    %173 = vmatpush1.msra.mxu0 %v101
    %174 = vmatprep.subr.mxu0 0.0
    %175 = vmatpush1.msra.mxu0 %v102
    %176 = vmatprep.subr.mxu0 0.0
    %177 = vmatpush1.msra.mxu0 %v103
    %178 = vmatprep.subr.mxu0 0.0
    %179 = vmatpush1.msra.mxu0 %v104
    %180 = vmatprep.subr.mxu0 0.0
    %181 = vmatpush1.msra.mxu0 %v105
    %182 = vmatprep.subr.mxu0 0.0
    %183 = vmatpush1.msra.mxu0 %v106
    %184 = vmatprep.subr.mxu0 0.0
    %185 = vmatpush1.msra.mxu0 %v107
    %186 = vmatprep.subr.mxu0 0.0
    %187 = vmatpush1.msra.mxu0 %v108
    %188 = vmatprep.subr.mxu0 0.0
    %189 = vmatpush1.msra.mxu0 %v109
    %190 = vmatprep.subr.mxu0 0.0
    %191 = vmatpush1.msra.mxu0 %v110
    %192 = vmatprep.subr.mxu0 0.0
    %193 = vmatpush1.msra.mxu0 %v111
    %194 = vmatprep.subr.mxu0 0.0
    %195 = vmatpush1.msra.mxu0 %v112
    %196 = vmatprep.subr.mxu0 0.0
    %197 = vmatpush1.msra.mxu0 %v113
    %198 = vmatprep.subr.mxu0 0.0
    %199 = vmatpush1.msra.mxu0 %v114
    %200 = vmatprep.subr.mxu0 0.0
    %201 = vmatpush1.msra.mxu0 %v115
    %202 = vmatprep.subr.mxu0 0.0
    %203 = vmatpush1.msra.mxu0 %v116
    %204 = vmatprep.subr.mxu0 0.0
    %205 = vmatpush1.msra.mxu0 %v117
    %206 = vmatprep.subr.mxu0 0.0
    %207 = vmatpush1.msra.mxu0 %v118
    %208 = vmatprep.subr.mxu0 0.0
    %209 = vmatpush1.msra.mxu0 %v119
    %210 = vmatprep.subr.mxu0 0.0
    %211 = vmatpush1.msra.mxu0 %v120
    %212 = vmatprep.subr.mxu0 0.0
    %213 = vmatpush1.msra.mxu0 %v121
    %214 = vmatprep.subr.mxu0 0.0
    %215 = vmatpush1.msra.mxu0 %v122
    %216 = vmatprep.subr.mxu0 0.0
    %217 = vmatpush1.msra.mxu0 %v123
    %218 = vmatprep.subr.mxu0 0.0
    %219 = vmatpush1.msra.mxu0 %v124
    %220 = vmatprep.subr.mxu0 0.0
    %221 = vmatpush1.msra.mxu0 %v125
    %222 = vmatprep.mubr.f32.mxu0 %v31
    %223 = vmatmul.mubr.f32.gmra.mrb[0].mxu0 %v30
    %v224 = vpop.f32.mrb[0].mxu0
    %v225 = vadd.f32 0.0, %v224
    %v226 = vpop.f32.mrb[0].mxu0
    %227 = vmatprep.mubr.f32.mxu0 %v35
    %228 = vmatmul.mubr.f32.gmra.mrb[0].mxu0 %v34
    %v229 = vpop.f32.mrb[0].mxu0
    %v230 = vadd.f32 0.0, %v229
    %v231 = vpop.f32.mrb[0].mxu0
    %232 = vmatprep.mubr.f32.mxu0 %v39
    %233 = vmatmul.mubr.f32.gmra.mrb[0].mxu0 %v38
    %v234 = vpop.f32.mrb[0].mxu0
    %v235 = vadd.f32 0.0, %v234
    %v236 = vpop.f32.mrb[0].mxu0
    %237 = vmatprep.mubr.f32.mxu0 %v43
    %238 = vmatmul.mubr.f32.gmra.mrb[0].mxu0 %v42
    %v239 = vpop.f32.mrb[0].mxu0
    %v240 = vadd.f32 0.0, %v239
    %v241 = vpop.f32.mrb[0].mxu0
    %242 = vmatprep.mubr.f32.mxu0 %v47
    %243 = vmatmul.mubr.f32.gmra.mrb[0].mxu0 %v46
    %v244 = vpop.f32.mrb[0].mxu0
    %v245 = vadd.f32 0.0, %v244
    %v246 = vpop.f32.mrb[0].mxu0
    %247 = vmatprep.mubr.f32.mxu0 %v51
    %248 = vmatmul.mubr.f32.gmra.mrb[0].mxu0 %v50
    %v249 = vpop.f32.mrb[0].mxu0
    %v250 = vadd.f32 0.0, %v249
    %v251 = vpop.f32.mrb[0].mxu0
    %252 = vmatprep.mubr.f32.mxu0 %v55
    %253 = vmatmul.mubr.f32.gmra.mrb[0].mxu0 %v54
    %v254 = vpop.f32.mrb[0].mxu0
    %v255 = vadd.f32 0.0, %v254
    %v256 = vpop.f32.mrb[0].mxu0
    %257 = vmatprep.mubr.f32.mxu0 %v59
    %258 = vmatmul.mubr.f32.gmra.mrb[0].mxu0 %v58
    %v259 = vpop.f32.mrb[0].mxu0
    %v260 = vadd.f32 0.0, %v259
    %v261 = vpop.f32.mrb[0].mxu0
    %262 = vmatprep.mubr.f32.mxu0 %v63
    %263 = vmatmul.mubr.f32.gmra.mrb[0].mxu0 %v62
    %v264 = vpop.f32.mrb[0].mxu0
    %v265 = vadd.f32 0.0, %v264
    %v266 = vpop.f32.mrb[0].mxu0
    %267 = vmatprep.mubr.f32.mxu0 %v67
    %268 = vmatmul.mubr.f32.gmra.mrb[0].mxu0 %v66
    %v269 = vpop.f32.mrb[0].mxu0
    %v270 = vadd.f32 0.0, %v269
    %v271 = vpop.f32.mrb[0].mxu0
    %272 = vmatprep.mubr.f32.mxu0 %v71
    %273 = vmatmul.mubr.f32.gmra.mrb[0].mxu0 %v70
    %v274 = vpop.f32.mrb[0].mxu0
    %v275 = vadd.f32 0.0, %v274
    %v276 = vpop.f32.mrb[0].mxu0
    %277 = vmatprep.mubr.f32.mxu0 %v75
    %278 = vmatmul.mubr.f32.gmra.mrb[0].mxu0 %v74
    %v279 = vpop.f32.mrb[0].mxu0
    %v280 = vadd.f32 0.0, %v279
    %v281 = vpop.f32.mrb[0].mxu0
    %282 = vmatprep.mubr.f32.mxu0 %v79
    %283 = vmatmul.mubr.f32.gmra.mrb[0].mxu0 %v78
    %v284 = vpop.f32.mrb[0].mxu0
    %v285 = vadd.f32 0.0, %v284
    %v286 = vpop.f32.mrb[0].mxu0
    %287 = vmatprep.mubr.f32.mxu0 %v83
    %288 = vmatmul.mubr.f32.gmra.mrb[0].mxu0 %v82
    %v289 = vpop.f32.mrb[0].mxu0
    %v290 = vadd.f32 0.0, %v289
    %v291 = vpop.f32.mrb[0].mxu0
    %292 = vmatprep.mubr.f32.mxu0 %v87
    %293 = vmatmul.mubr.f32.gmra.mrb[0].mxu0 %v86
    %v294 = vpop.f32.mrb[0].mxu0
    %v295 = vadd.f32 0.0, %v294
    %v296 = vpop.f32.mrb[0].mxu0
    %297 = vmatprep.mubr.f32.mxu0 %v91
    %298 = vmatmul.mubr.f32.gmra.mrb[0].mxu0 %v90
    %v299 = vpop.f32.mrb[0].mxu0
    %v300 = vadd.f32 0.0, %v299
    %v301 = vpop.f32.mrb[0].mxu0
    %302 = vdwg.mxu0
    %303 = vmatprep.subr.mxu0 0.0
    %304 = vmatpush1.msra.mxu0 %v126
    %305 = vmatprep.subr.mxu0 0.0
    %306 = vmatpush1.msra.mxu0 %v127
    %307 = vmatprep.subr.mxu0 0.0
    %308 = vmatpush1.msra.mxu0 %v128
    %309 = vmatprep.subr.mxu0 0.0
    %310 = vmatpush1.msra.mxu0 %v129
    %311 = vmatprep.subr.mxu0 0.0
    %312 = vmatpush1.msra.mxu0 %v130
    %313 = vmatprep.subr.mxu0 0.0
    %314 = vmatpush1.msra.mxu0 %v131
    %315 = vmatprep.subr.mxu0 0.0
    %316 = vmatpush1.msra.mxu0 %v132
    %317 = vmatprep.subr.mxu0 0.0
    %318 = vmatpush1.msra.mxu0 %v133
    %319 = vmatprep.subr.mxu0 0.0
    %320 = vmatpush1.msra.mxu0 %v134
    %321 = vmatprep.subr.mxu0 0.0
    %322 = vmatpush1.msra.mxu0 %v135
    %323 = vmatprep.subr.mxu0 0.0
    %324 = vmatpush1.msra.mxu0 %v136
    %325 = vmatprep.subr.mxu0 0.0
    %326 = vmatpush1.msra.mxu0 %v137
    %327 = vmatprep.subr.mxu0 0.0
    %328 = vmatpush1.msra.mxu0 %v138
    %329 = vmatprep.subr.mxu0 0.0
    %330 = vmatpush1.msra.mxu0 %v139
    %331 = vmatprep.subr.mxu0 0.0
    %332 = vmatpush1.msra.mxu0 %v140
    %333 = vmatprep.subr.mxu0 0.0
    %334 = vmatpush1.msra.mxu0 %v141
    %335 = vmatprep.subr.mxu0 0.0
    %336 = vmatpush1.msra.mxu0 %v142
    %337 = vmatprep.subr.mxu0 0.0
    %338 = vmatpush1.msra.mxu0 %v143
    %339 = vmatprep.subr.mxu0 0.0
    %340 = vmatpush1.msra.mxu0 %v144
    %341 = vmatprep.subr.mxu0 0.0
    %342 = vmatpush1.msra.mxu0 %v145
    %343 = vmatprep.subr.mxu0 0.0
    %344 = vmatpush1.msra.mxu0 %v146
    %345 = vmatprep.subr.mxu0 0.0
    %346 = vmatpush1.msra.mxu0 %v147
    %347 = vmatprep.subr.mxu0 0.0
    %348 = vmatpush1.msra.mxu0 %v148
    %349 = vmatprep.subr.mxu0 0.0
    %350 = vmatpush1.msra.mxu0 %v149
    %351 = vmatprep.subr.mxu0 0.0
    %352 = vmatpush1.msra.mxu0 %v150
    %353 = vmatprep.subr.mxu0 0.0
    %354 = vmatpush1.msra.mxu0 %v151
    %355 = vmatprep.subr.mxu0 0.0
    %356 = vmatpush1.msra.mxu0 %v152
    %357 = vmatprep.subr.mxu0 0.0
    %358 = vmatpush1.msra.mxu0 %v153
    %359 = vmatprep.subr.mxu0 0.0
    %360 = vmatpush1.msra.mxu0 %v154
    %361 = vmatprep.subr.mxu0 0.0
    %362 = vmatpush1.msra.mxu0 %v155
    %363 = vmatprep.subr.mxu0 0.0
    %364 = vmatpush1.msra.mxu0 %v156
    %365 = vmatprep.subr.mxu0 0.0
    %366 = vmatpush1.msra.mxu0 %v157
    %367 = vmatprep.mubr.f32.mxu0 %v33
    %368 = vmatmul.mubr.f32.gmra.mrb[0].mxu0 %v32
    %v369 = vpop.f32.mrb[0].mxu0
    %v370 = vadd.f32 %v225, %v369
    %v371 = vpop.f32.mrb[0].mxu0
    %372 = vmatprep.mubr.f32.mxu0 %v37
    %373 = vmatmul.mubr.f32.gmra.mrb[0].mxu0 %v36
    %v374 = vpop.f32.mrb[0].mxu0
    %v375 = vadd.f32 %v230, %v374
    %v376 = vpop.f32.mrb[0].mxu0
    %377 = vmatprep.mubr.f32.mxu0 %v41
    %378 = vmatmul.mubr.f32.gmra.mrb[0].mxu0 %v40
    %v379 = vpop.f32.mrb[0].mxu0
    %v380 = vadd.f32 %v235, %v379
    %v381 = vpop.f32.mrb[0].mxu0
    %382 = vmatprep.mubr.f32.mxu0 %v45
    %383 = vmatmul.mubr.f32.gmra.mrb[0].mxu0 %v44
    %v384 = vpop.f32.mrb[0].mxu0
    %v385 = vadd.f32 %v240, %v384
    %v386 = vpop.f32.mrb[0].mxu0
    %387 = vmatprep.mubr.f32.mxu0 %v49
    %388 = vmatmul.mubr.f32.gmra.mrb[0].mxu0 %v48
    %v389 = vpop.f32.mrb[0].mxu0
    %v390 = vadd.f32 %v245, %v389
    %v391 = vpop.f32.mrb[0].mxu0
    %392 = vmatprep.mubr.f32.mxu0 %v53
    %393 = vmatmul.mubr.f32.gmra.mrb[0].mxu0 %v52
    %v394 = vpop.f32.mrb[0].mxu0
    %v395 = vadd.f32 %v250, %v394
    %v396 = vpop.f32.mrb[0].mxu0
    %397 = vmatprep.mubr.f32.mxu0 %v57
    %398 = vmatmul.mubr.f32.gmra.mrb[0].mxu0 %v56
    %v399 = vpop.f32.mrb[0].mxu0
    %v400 = vadd.f32 %v255, %v399
    %v401 = vpop.f32.mrb[0].mxu0
    %402 = vmatprep.mubr.f32.mxu0 %v61
    %403 = vmatmul.mubr.f32.gmra.mrb[0].mxu0 %v60
    %v404 = vpop.f32.mrb[0].mxu0
    %v405 = vadd.f32 %v260, %v404
    %v406 = vpop.f32.mrb[0].mxu0
    %407 = vmatprep.mubr.f32.mxu0 %v65
    %408 = vmatmul.mubr.f32.gmra.mrb[0].mxu0 %v64
    %v409 = vpop.f32.mrb[0].mxu0
    %v410 = vadd.f32 %v265, %v409
    %v411 = vpop.f32.mrb[0].mxu0
    %412 = vmatprep.mubr.f32.mxu0 %v69
    %413 = vmatmul.mubr.f32.gmra.mrb[0].mxu0 %v68
    %v414 = vpop.f32.mrb[0].mxu0
    %v415 = vadd.f32 %v270, %v414
    %v416 = vpop.f32.mrb[0].mxu0
    %417 = vmatprep.mubr.f32.mxu0 %v73
    %418 = vmatmul.mubr.f32.gmra.mrb[0].mxu0 %v72
    %v419 = vpop.f32.mrb[0].mxu0
    %v420 = vadd.f32 %v275, %v419
    %v421 = vpop.f32.mrb[0].mxu0
    %422 = vmatprep.mubr.f32.mxu0 %v77
    %423 = vmatmul.mubr.f32.gmra.mrb[0].mxu0 %v76
    %v424 = vpop.f32.mrb[0].mxu0
    %v425 = vadd.f32 %v280, %v424
    %v426 = vpop.f32.mrb[0].mxu0
    %427 = vmatprep.mubr.f32.mxu0 %v81
    %428 = vmatmul.mubr.f32.gmra.mrb[0].mxu0 %v80
    %v429 = vpop.f32.mrb[0].mxu0
    %v430 = vadd.f32 %v285, %v429
    %v431 = vpop.f32.mrb[0].mxu0
    %432 = vmatprep.mubr.f32.mxu0 %v85
    %433 = vmatmul.mubr.f32.gmra.mrb[0].mxu0 %v84
    %v434 = vpop.f32.mrb[0].mxu0
    %v435 = vadd.f32 %v290, %v434
    %v436 = vpop.f32.mrb[0].mxu0
    %437 = vmatprep.mubr.f32.mxu0 %v89
    %438 = vmatmul.mubr.f32.gmra.mrb[0].mxu0 %v88
    %v439 = vpop.f32.mrb[0].mxu0
    %v440 = vadd.f32 %v295, %v439
    %v441 = vpop.f32.mrb[0].mxu0
    %442 = vmatprep.mubr.f32.mxu0 %v93
    %443 = vmatmul.mubr.f32.gmra.mrb[0].mxu0 %v92
    %v444 = vpop.f32.mrb[0].mxu0
    %v445 = vadd.f32 %v300, %v444
    %v446 = vpop.f32.mrb[0].mxu0
    %447 = vdwg.mxu0
    %vm448 = vcmask 31744
    %449 = vst.msk [vmem:[#allocation2] sm:$0xff] %vm448, %v370
    %451 = vrot.lane.b32.xlu0 %v375, 4
    %v452 = vpop.permute.xlu0 %451
    %vm454 = vcmask 64544
    %455 = vst.msk [vmem:[#allocation2] sm:$0xff] %vm454, %v452
    %457 = vrot.lane.b32.xlu0 %v380, 8
    %v458 = vpop.permute.xlu0 %457
    %vm460 = vcmask 97344
    %461 = vst.msk [vmem:[#allocation2] sm:$0xff] %vm460, %v458
    %463 = vrot.lane.b32.xlu0 %v385, 12
    %v464 = vpop.permute.xlu0 %463
    %vm466 = vcmask 130144
    %467 = vst.msk [vmem:[#allocation2] sm:$0xff] %vm466, %v464
    %469 = vrot.lane.b32.xlu0 %v390, 16
    %v470 = vpop.permute.xlu0 %469
    %vm472 = vcmask 162944
    %473 = vst.msk [vmem:[#allocation2] sm:$0xff] %vm472, %v470
    %475 = vrot.lane.b32.xlu0 %v395, 20
    %v476 = vpop.permute.xlu0 %475
    %vm478 = vcmask 195744
    %479 = vst.msk [vmem:[#allocation2] sm:$0xff] %vm478, %v476
    %481 = vrot.lane.b32.xlu0 %v400, 24
    %v482 = vpop.permute.xlu0 %481
    %vm484 = vcmask 228544
    %485 = vst.msk [vmem:[#allocation2] sm:$0xff] %vm484, %v482
    %487 = vrot.lane.b32.xlu0 %v405, 28
    %v488 = vpop.permute.xlu0 %487
    %vm490 = vcmask 261344
    %491 = vst.msk [vmem:[#allocation2] sm:$0xff] %vm490, %v488
    %493 = vrot.lane.b32.xlu0 %v410, 32
    %v494 = vpop.permute.xlu0 %493
    %vm496 = vcmask 294144
    %497 = vst.msk [vmem:[#allocation2] sm:$0xff] %vm496, %v494
    %499 = vrot.lane.b32.xlu0 %v415, 36
    %v500 = vpop.permute.xlu0 %499
    %vm502 = vcmask 326944
    %503 = vst.msk [vmem:[#allocation2] sm:$0xff] %vm502, %v500
    %505 = vrot.lane.b32.xlu0 %v420, 40
    %v506 = vpop.permute.xlu0 %505
    %vm508 = vcmask 359744
    %509 = vst.msk [vmem:[#allocation2] sm:$0xff] %vm508, %v506
    %511 = vrot.lane.b32.xlu0 %v425, 44
    %v512 = vpop.permute.xlu0 %511
    %vm514 = vcmask 392544
    %515 = vst.msk [vmem:[#allocation2] sm:$0xff] %vm514, %v512
    %517 = vrot.lane.b32.xlu0 %v430, 48
    %v518 = vpop.permute.xlu0 %517
    %vm520 = vcmask 425344
    %521 = vst.msk [vmem:[#allocation2] sm:$0xff] %vm520, %v518
    %523 = vrot.lane.b32.xlu0 %v435, 52
    %v524 = vpop.permute.xlu0 %523
    %vm526 = vcmask 458144
    %527 = vst.msk [vmem:[#allocation2] sm:$0xff] %vm526, %v524
    %529 = vrot.lane.b32.xlu0 %v440, 56
    %v530 = vpop.permute.xlu0 %529
    %vm532 = vcmask 490944
    %533 = vst.msk [vmem:[#allocation2] sm:$0xff] %vm532, %v530
    %535 = vrot.lane.b32.xlu0 %v445, 60
    %v536 = vpop.permute.xlu0 %535
    %vm538 = vcmask 523744
    %539 = vst.msk [vmem:[#allocation2] sm:$0xff] %vm538, %v536
    %v540 = vld [vmem:[%s2] sm:$0xff]
    %542 = vrot.lane.b32.xlu0 %v540, 64
    %v543 = vpop.permute.xlu0 %542
    %vm545 = vcmask 589312
    %546 = vst.msk [vmem:[#allocation2] sm:$0xff] %vm545, %v543
    %v547 = vld [vmem:[#allocation2] sm:$0xff]
    %v548 = vld [vmem:[%s7] sm:$0x3]
    %v549 = vld [vmem:[%s4] sm:$0xff]
    %v550 = vld [vmem:[%s4 + $0x8] sm:$0xff]
    %v551 = vld [vmem:[%s4 + $0x10] sm:$0xff]
    %v552 = vld [vmem:[%s4 + $0x18] sm:$0xff]
    %v553 = vld [vmem:[%s4 + $0x20] sm:$0xff]
    %v554 = vld [vmem:[%s4 + $0x28] sm:$0xff]
    %v555 = vld [vmem:[%s4 + $0x30] sm:$0xff]
    %v556 = vld [vmem:[%s4 + $0x38] sm:$0xff]
    %v557 = vld [vmem:[%s4 + $0x40] sm:$0xff]
    %v559 = vlaneseq
    %v560 = vshrl.u32 %v559, 7
    %v561 = vsub.s32 0, %v560
    %v562 = vrot.slane %v548, %v561
    %vm564 = vcmask 588800
    %v566 = vsel %vm564, %v547, 0
    %568 = vmatprep.subr.mxu0 0.0
    %569 = vmatpush1.msra.mxu0 %v549
    %570 = vmatprep.subr.mxu0 0.0
    %571 = vmatpush1.msra.mxu0 %v550
    %572 = vmatprep.subr.mxu0 0.0
    %573 = vmatpush1.msra.mxu0 %v551
    %574 = vmatprep.subr.mxu0 0.0
    %575 = vmatpush1.msra.mxu0 %v552
    %576 = vmatprep.subr.mxu0 0.0
    %577 = vmatpush1.msra.mxu0 %v553
    %578 = vmatprep.subr.mxu0 0.0
    %579 = vmatpush1.msra.mxu0 %v554
    %580 = vmatprep.subr.mxu0 0.0
    %581 = vmatpush1.msra.mxu0 %v555
    %582 = vmatprep.subr.mxu0 0.0
    %583 = vmatpush1.msra.mxu0 %v556
    %584 = vmatprep.subr.mxu0 0.0
    %585 = vmatpush1.msra.mxu0 %v557
    %586 = vmatprep.subr.mxu0 0.0
    %587 = vmatpush1.msra.mxu0 0.0
    %588 = vmatprep.subr.mxu0 0.0
    %589 = vmatpush1.msra.mxu0 0.0
    %590 = vmatprep.subr.mxu0 0.0
    %591 = vmatpush1.msra.mxu0 0.0
    %592 = vmatprep.subr.mxu0 0.0
    %593 = vmatpush1.msra.mxu0 0.0
    %594 = vmatprep.subr.mxu0 0.0
    %595 = vmatpush1.msra.mxu0 0.0
    %596 = vmatprep.subr.mxu0 0.0
    %597 = vmatpush1.msra.mxu0 0.0
    %598 = vmatprep.subr.mxu0 0.0
    %599 = vmatpush1.msra.mxu0 0.0
    %600 = vmatprep.subr.mxu0 0.0
    %601 = vmatpush1.msra.mxu0 0.0
    %602 = vmatprep.subr.mxu0 0.0
    %603 = vmatpush1.msra.mxu0 0.0
    %604 = vmatprep.subr.mxu0 0.0
    %605 = vmatpush1.msra.mxu0 0.0
    %606 = vmatprep.subr.mxu0 0.0
    %607 = vmatpush1.msra.mxu0 0.0
    %608 = vmatprep.subr.mxu0 0.0
    %609 = vmatpush1.msra.mxu0 0.0
    %610 = vmatprep.subr.mxu0 0.0
    %611 = vmatpush1.msra.mxu0 0.0
    %612 = vmatprep.subr.mxu0 0.0
    %613 = vmatpush1.msra.mxu0 0.0
    %614 = vmatprep.subr.mxu0 0.0
    %615 = vmatpush1.msra.mxu0 0.0
    %616 = vmatprep.subr.mxu0 0.0
    %617 = vmatpush1.msra.mxu0 0.0
    %618 = vmatprep.subr.mxu0 0.0
    %619 = vmatpush1.msra.mxu0 0.0
    %620 = vmatprep.subr.mxu0 0.0
    %621 = vmatpush1.msra.mxu0 0.0
    %622 = vmatprep.subr.mxu0 0.0
    %623 = vmatpush1.msra.mxu0 0.0
    %624 = vmatprep.subr.mxu0 0.0
    %625 = vmatpush1.msra.mxu0 0.0
    %626 = vmatprep.subr.mxu0 0.0
    %627 = vmatpush1.msra.mxu0 0.0
    %628 = vmatprep.subr.mxu0 0.0
    %629 = vmatpush1.msra.mxu0 0.0
    %630 = vmatprep.subr.mxu0 0.0
    %631 = vmatpush1.msra.mxu0 0.0
    %632 = vmatprep.mubr.f32.mxu0 0.0
    %633 = vmatmul.mubr.f32.gmra.mrb[0].mxu0 %v566
    %v634 = vpop.f32.mrb[0].mxu0
    %v635 = vadd.f32 %v562, %v634
    %v636 = vpop.f32.mrb[0].mxu0
    %637 = vdwg.mxu0
    %v638 = vmax.f32 %v635, 0.0
    %v639 = vld [vmem:[%s5] sm:$0xff]
    %v640 = vld [vmem:[%s5 + $0x8] sm:$0xff]
    %v641 = vld [vmem:[%s5 + $0x10] sm:$0xff]
    %v642 = vld [vmem:[%s5 + $0x18] sm:$0xff]
    %v643 = vld [vmem:[%s5 + $0x20] sm:$0xff]
    %v644 = vld [vmem:[%s5 + $0x28] sm:$0xff]
    %v645 = vld [vmem:[%s5 + $0x30] sm:$0xff]
    %v646 = vld [vmem:[%s5 + $0x38] sm:$0xff]
    %647 = vrot.lane.b32.xlu0 %v562, 64
    %v648 = vpop.permute.xlu0 %647
    %vm650 = vcmask 523264
    %v652 = vsel %vm650, %v638, 0
    %654 = vmatprep.subr.mxu0 0.0
    %655 = vmatpush1.msra.mxu0 %v639
    %656 = vmatprep.subr.mxu0 0.0
    %657 = vmatpush1.msra.mxu0 %v640
    %658 = vmatprep.subr.mxu0 0.0
    %659 = vmatpush1.msra.mxu0 %v641
    %660 = vmatprep.subr.mxu0 0.0
    %661 = vmatpush1.msra.mxu0 %v642
    %662 = vmatprep.subr.mxu0 0.0
    %663 = vmatpush1.msra.mxu0 %v643
    %664 = vmatprep.subr.mxu0 0.0
    %665 = vmatpush1.msra.mxu0 %v644
    %666 = vmatprep.subr.mxu0 0.0
    %667 = vmatpush1.msra.mxu0 %v645
    %668 = vmatprep.subr.mxu0 0.0
    %669 = vmatpush1.msra.mxu0 %v646
    %670 = vmatprep.subr.mxu0 0.0
    %671 = vmatpush1.msra.mxu0 0.0
    %672 = vmatprep.subr.mxu0 0.0
    %673 = vmatpush1.msra.mxu0 0.0
    %674 = vmatprep.subr.mxu0 0.0
    %675 = vmatpush1.msra.mxu0 0.0
    %676 = vmatprep.subr.mxu0 0.0
    %677 = vmatpush1.msra.mxu0 0.0
    %678 = vmatprep.subr.mxu0 0.0
    %679 = vmatpush1.msra.mxu0 0.0
    %680 = vmatprep.subr.mxu0 0.0
    %681 = vmatpush1.msra.mxu0 0.0
    %682 = vmatprep.subr.mxu0 0.0
    %683 = vmatpush1.msra.mxu0 0.0
    %684 = vmatprep.subr.mxu0 0.0
    %685 = vmatpush1.msra.mxu0 0.0
    %686 = vmatprep.subr.mxu0 0.0
    %687 = vmatpush1.msra.mxu0 0.0
    %688 = vmatprep.subr.mxu0 0.0
    %689 = vmatpush1.msra.mxu0 0.0
    %690 = vmatprep.subr.mxu0 0.0
    %691 = vmatpush1.msra.mxu0 0.0
    %692 = vmatprep.subr.mxu0 0.0
    %693 = vmatpush1.msra.mxu0 0.0
    %694 = vmatprep.subr.mxu0 0.0
    %695 = vmatpush1.msra.mxu0 0.0
    %696 = vmatprep.subr.mxu0 0.0
    %697 = vmatpush1.msra.mxu0 0.0
    %698 = vmatprep.subr.mxu0 0.0
    %699 = vmatpush1.msra.mxu0 0.0
    %700 = vmatprep.subr.mxu0 0.0
    %701 = vmatpush1.msra.mxu0 0.0
    %702 = vmatprep.subr.mxu0 0.0
    %703 = vmatpush1.msra.mxu0 0.0
    %704 = vmatprep.subr.mxu0 0.0
    %705 = vmatpush1.msra.mxu0 0.0
    %706 = vmatprep.subr.mxu0 0.0
    %707 = vmatpush1.msra.mxu0 0.0
    %708 = vmatprep.subr.mxu0 0.0
    %709 = vmatpush1.msra.mxu0 0.0
    %710 = vmatprep.subr.mxu0 0.0
    %711 = vmatpush1.msra.mxu0 0.0
    %712 = vmatprep.subr.mxu0 0.0
    %713 = vmatpush1.msra.mxu0 0.0
    %714 = vmatprep.subr.mxu0 0.0
    %715 = vmatpush1.msra.mxu0 0.0
    %716 = vmatprep.subr.mxu0 0.0
    %717 = vmatpush1.msra.mxu0 0.0
    %718 = vmatprep.mubr.f32.mxu0 0.0
    %719 = vmatmul.mubr.f32.gmra.mrb[0].mxu0 %v652
    %v720 = vpop.f32.mrb[0].mxu0
    %v721 = vadd.f32 %v648, %v720
    %v722 = vpop.f32.mrb[0].mxu0
    %723 = vdwg.mxu0
    %v724 = vld [vmem:[%s6] sm:$0xff]
    %v725 = vld [vmem:[%s6 + $0x8] sm:$0x3]
    %726 = vrot.lane.b32.xlu0 %v562, 56
    %v727 = vpop.permute.xlu0 %726
    %vm729 = vcmask 64512
    %v731 = vsel %vm729, %v721, 0
    %733 = vmatprep.subr.mxu0 0.0
    %734 = vmatpush1.msra.mxu0 %v724
    %735 = vmatprep.subr.mxu0 0.0
    %736 = vmatpush1.msra.mxu0 0.0
    %737 = vmatprep.subr.mxu0 0.0
    %738 = vmatpush1.msra.mxu0 0.0
    %739 = vmatprep.subr.mxu0 0.0
    %740 = vmatpush1.msra.mxu0 0.0
    %741 = vmatprep.subr.mxu0 0.0
    %742 = vmatpush1.msra.mxu0 0.0
    %743 = vmatprep.subr.mxu0 0.0
    %744 = vmatpush1.msra.mxu0 0.0
    %745 = vmatprep.subr.mxu0 0.0
    %746 = vmatpush1.msra.mxu0 0.0
    %747 = vmatprep.subr.mxu0 0.0
    %748 = vmatpush1.msra.mxu0 0.0
    %749 = vmatprep.subr.mxu0 0.0
    %750 = vmatpush1.msra.mxu0 0.0
    %751 = vmatprep.subr.mxu0 0.0
    %752 = vmatpush1.msra.mxu0 0.0
    %753 = vmatprep.subr.mxu0 0.0
    %754 = vmatpush1.msra.mxu0 0.0
    %755 = vmatprep.subr.mxu0 0.0
    %756 = vmatpush1.msra.mxu0 0.0
    %757 = vmatprep.subr.mxu0 0.0
    %758 = vmatpush1.msra.mxu0 0.0
    %759 = vmatprep.subr.mxu0 0.0
    %760 = vmatpush1.msra.mxu0 0.0
    %761 = vmatprep.subr.mxu0 0.0
    %762 = vmatpush1.msra.mxu0 0.0
    %763 = vmatprep.subr.mxu0 0.0
    %764 = vmatpush1.msra.mxu0 0.0
    %765 = vmatprep.subr.mxu0 0.0
    %766 = vmatpush1.msra.mxu0 0.0
    %767 = vmatprep.subr.mxu0 0.0
    %768 = vmatpush1.msra.mxu0 0.0
    %769 = vmatprep.subr.mxu0 0.0
    %770 = vmatpush1.msra.mxu0 0.0
    %771 = vmatprep.subr.mxu0 0.0
    %772 = vmatpush1.msra.mxu0 0.0
    %773 = vmatprep.subr.mxu0 0.0
    %774 = vmatpush1.msra.mxu0 0.0
    %775 = vmatprep.subr.mxu0 0.0
    %776 = vmatpush1.msra.mxu0 0.0
    %777 = vmatprep.subr.mxu0 0.0
    %778 = vmatpush1.msra.mxu0 0.0
    %779 = vmatprep.subr.mxu0 0.0
    %780 = vmatpush1.msra.mxu0 0.0
    %781 = vmatprep.subr.mxu0 0.0
    %782 = vmatpush1.msra.mxu0 0.0
    %783 = vmatprep.subr.mxu0 0.0
    %784 = vmatpush1.msra.mxu0 0.0
    %785 = vmatprep.subr.mxu0 0.0
    %786 = vmatpush1.msra.mxu0 0.0
    %787 = vmatprep.subr.mxu0 0.0
    %788 = vmatpush1.msra.mxu0 0.0
    %789 = vmatprep.subr.mxu0 0.0
    %790 = vmatpush1.msra.mxu0 0.0
    %791 = vmatprep.subr.mxu0 0.0
    %792 = vmatpush1.msra.mxu0 0.0
    %793 = vmatprep.subr.mxu0 0.0
    %794 = vmatpush1.msra.mxu0 0.0
    %795 = vmatprep.subr.mxu0 0.0
    %796 = vmatpush1.msra.mxu0 0.0
    %797 = vmatprep.mubr.f32.mxu0 0.0
    %798 = vmatmul.mubr.f32.gmra.mrb[0].mxu0 %v731
    %v799 = vpop.f32.mrb[0].mxu0
    %v800 = vadd.f32 %v727, %v799
    %v801 = vpop.f32.mrb[0].mxu0
    %802 = vdwg.mxu0
    %v803 = vtanh.pop %v800
    %v804 = vld [vmem:[%s3] sm:$0xff]
    %v806 = vsel %vm729, %v804, 0
    %808 = vmatprep.subr.mxu0 0.0
    %809 = vmatpush1.msra.mxu0 %v803
    %810 = vmatprep.subr.mxu0 0.0
    %811 = vmatpush1.msra.mxu0 0.0
    %812 = vmatprep.subr.mxu0 0.0
    %813 = vmatpush1.msra.mxu0 0.0
    %814 = vmatprep.subr.mxu0 0.0
    %815 = vmatpush1.msra.mxu0 0.0
    %816 = vmatprep.subr.mxu0 0.0
    %817 = vmatpush1.msra.mxu0 0.0
    %818 = vmatprep.subr.mxu0 0.0
    %819 = vmatpush1.msra.mxu0 0.0
    %820 = vmatprep.subr.mxu0 0.0
    %821 = vmatpush1.msra.mxu0 0.0
    %822 = vmatprep.subr.mxu0 0.0
    %823 = vmatpush1.msra.mxu0 0.0
    %824 = vmatprep.subr.mxu0 0.0
    %825 = vmatpush1.msra.mxu0 0.0
    %826 = vmatprep.subr.mxu0 0.0
    %827 = vmatpush1.msra.mxu0 0.0
    %828 = vmatprep.subr.mxu0 0.0
    %829 = vmatpush1.msra.mxu0 0.0
    %830 = vmatprep.subr.mxu0 0.0
    %831 = vmatpush1.msra.mxu0 0.0
    %832 = vmatprep.subr.mxu0 0.0
    %833 = vmatpush1.msra.mxu0 0.0
    %834 = vmatprep.subr.mxu0 0.0
    %835 = vmatpush1.msra.mxu0 0.0
    %836 = vmatprep.subr.mxu0 0.0
    %837 = vmatpush1.msra.mxu0 0.0
    %838 = vmatprep.subr.mxu0 0.0
    %839 = vmatpush1.msra.mxu0 0.0
    %840 = vmatprep.subr.mxu0 0.0
    %841 = vmatpush1.msra.mxu0 0.0
    %842 = vmatprep.subr.mxu0 0.0
    %843 = vmatpush1.msra.mxu0 0.0
    %844 = vmatprep.subr.mxu0 0.0
    %845 = vmatpush1.msra.mxu0 0.0
    %846 = vmatprep.subr.mxu0 0.0
    %847 = vmatpush1.msra.mxu0 0.0
    %848 = vmatprep.subr.mxu0 0.0
    %849 = vmatpush1.msra.mxu0 0.0
    %850 = vmatprep.subr.mxu0 0.0
    %851 = vmatpush1.msra.mxu0 0.0
    %852 = vmatprep.subr.mxu0 0.0
    %853 = vmatpush1.msra.mxu0 0.0
    %854 = vmatprep.subr.mxu0 0.0
    %855 = vmatpush1.msra.mxu0 0.0
    %856 = vmatprep.subr.mxu0 0.0
    %857 = vmatpush1.msra.mxu0 0.0
    %858 = vmatprep.subr.mxu0 0.0
    %859 = vmatpush1.msra.mxu0 0.0
    %860 = vmatprep.subr.mxu0 0.0
    %861 = vmatpush1.msra.mxu0 0.0
    %862 = vmatprep.subr.mxu0 0.0
    %863 = vmatpush1.msra.mxu0 0.0
    %864 = vmatprep.subr.mxu0 0.0
    %865 = vmatpush1.msra.mxu0 0.0
    %866 = vmatprep.subr.mxu0 0.0
    %867 = vmatpush1.msra.mxu0 0.0
    %868 = vmatprep.subr.mxu0 0.0
    %869 = vmatpush1.msra.mxu0 0.0
    %870 = vmatprep.subr.mxu0 0.0
    %871 = vmatpush1.msra.mxu0 0.0
    %872 = vmatprep.mubr.f32.mxu0 0.0
    %873 = vmatmul.mubr.f32.gmra.mrb[0].mxu0 %v806
    %v874 = vpop.f32.mrb[0].mxu0
    %v875 = vadd.f32 0.0, %v874
    %v876 = vpop.f32.mrb[0].mxu0
    %877 = vdwg.mxu0
    %880 = vrot.lane.b32.xlu0 %v724, 118
    %v881 = vpop.permute.xlu0 %880
    %882 = vrot.lane.b32.xlu0 %v725, 118
    %v883 = vpop.permute.xlu0 %882
    %885 = vrot.lane.b32.xlu0 %v562, 46
    %v886 = vpop.permute.xlu0 %885
    %vm888 = vcmask 80896
    %v890 = vsel %vm888, %v875, 0
    %vm892 = vcmask 1041408
    %v893 = vsel %vm892, %v883, 0
    %895 = vmatprep.subr.mxu0 0.0
    %896 = vmatpush1.msra.mxu0 %v881
    %897 = vmatprep.subr.mxu0 0.0
    %898 = vmatpush1.msra.mxu0 %v893
    %899 = vmatprep.subr.mxu0 0.0
    %900 = vmatpush1.msra.mxu0 0.0
    %901 = vmatprep.subr.mxu0 0.0
    %902 = vmatpush1.msra.mxu0 0.0
    %903 = vmatprep.subr.mxu0 0.0
    %904 = vmatpush1.msra.mxu0 0.0
    %905 = vmatprep.subr.mxu0 0.0
    %906 = vmatpush1.msra.mxu0 0.0
    %907 = vmatprep.subr.mxu0 0.0
    %908 = vmatpush1.msra.mxu0 0.0
    %909 = vmatprep.subr.mxu0 0.0
    %910 = vmatpush1.msra.mxu0 0.0
    %911 = vmatprep.subr.mxu0 0.0
    %912 = vmatpush1.msra.mxu0 0.0
    %913 = vmatprep.subr.mxu0 0.0
    %914 = vmatpush1.msra.mxu0 0.0
    %915 = vmatprep.subr.mxu0 0.0
    %916 = vmatpush1.msra.mxu0 0.0
    %917 = vmatprep.subr.mxu0 0.0
    %918 = vmatpush1.msra.mxu0 0.0
    %919 = vmatprep.subr.mxu0 0.0
    %920 = vmatpush1.msra.mxu0 0.0
    %921 = vmatprep.subr.mxu0 0.0
    %922 = vmatpush1.msra.mxu0 0.0
    %923 = vmatprep.subr.mxu0 0.0
    %924 = vmatpush1.msra.mxu0 0.0
    %925 = vmatprep.subr.mxu0 0.0
    %926 = vmatpush1.msra.mxu0 0.0
    %927 = vmatprep.subr.mxu0 0.0
    %928 = vmatpush1.msra.mxu0 0.0
    %929 = vmatprep.subr.mxu0 0.0
    %930 = vmatpush1.msra.mxu0 0.0
    %931 = vmatprep.subr.mxu0 0.0
    %932 = vmatpush1.msra.mxu0 0.0
    %933 = vmatprep.subr.mxu0 0.0
    %934 = vmatpush1.msra.mxu0 0.0
    %935 = vmatprep.subr.mxu0 0.0
    %936 = vmatpush1.msra.mxu0 0.0
    %937 = vmatprep.subr.mxu0 0.0
    %938 = vmatpush1.msra.mxu0 0.0
    %939 = vmatprep.subr.mxu0 0.0
    %940 = vmatpush1.msra.mxu0 0.0
    %941 = vmatprep.subr.mxu0 0.0
    %942 = vmatpush1.msra.mxu0 0.0
    %943 = vmatprep.subr.mxu0 0.0
    %944 = vmatpush1.msra.mxu0 0.0
    %945 = vmatprep.subr.mxu0 0.0
    %946 = vmatpush1.msra.mxu0 0.0
    %947 = vmatprep.subr.mxu0 0.0
    %948 = vmatpush1.msra.mxu0 0.0
    %949 = vmatprep.subr.mxu0 0.0
    %950 = vmatpush1.msra.mxu0 0.0
    %951 = vmatprep.subr.mxu0 0.0
    %952 = vmatpush1.msra.mxu0 0.0
    %953 = vmatprep.subr.mxu0 0.0
    %954 = vmatpush1.msra.mxu0 0.0
    %955 = vmatprep.subr.mxu0 0.0
    %956 = vmatpush1.msra.mxu0 0.0
    %957 = vmatprep.subr.mxu0 0.0
    %958 = vmatpush1.msra.mxu0 0.0
    %959 = vmatprep.mubr.f32.mxu0 0.0
    %960 = vmatmul.mubr.f32.gmra.mrb[0].mxu0 %v890
    %v961 = vpop.f32.mrb[0].mxu0
    %v962 = vadd.f32 %v886, %v961
    %v963 = vpop.f32.mrb[0].mxu0
    %964 = vdwg.mxu0
    %965 = vrot.lane.b32.xlu0 %v724, 108
    %v966 = vpop.permute.xlu0 %965
    %967 = vrot.lane.b32.xlu0 %v725, 108
    %v968 = vpop.permute.xlu0 %967
    %v971 = vsel %vm888, %v962, 0
    %v973 = vsel %vm892, %v968, 0
    %975 = vmatprep.subr.mxu0 0.0
    %976 = vmatpush1.msra.mxu0 %v966
    %977 = vmatprep.subr.mxu0 0.0
    %978 = vmatpush1.msra.mxu0 %v973
    %979 = vmatprep.subr.mxu0 0.0
    %980 = vmatpush1.msra.mxu0 0.0
    %981 = vmatprep.subr.mxu0 0.0
    %982 = vmatpush1.msra.mxu0 0.0
    %983 = vmatprep.subr.mxu0 0.0
    %984 = vmatpush1.msra.mxu0 0.0
    %985 = vmatprep.subr.mxu0 0.0
    %986 = vmatpush1.msra.mxu0 0.0
    %987 = vmatprep.subr.mxu0 0.0
    %988 = vmatpush1.msra.mxu0 0.0
    %989 = vmatprep.subr.mxu0 0.0
    %990 = vmatpush1.msra.mxu0 0.0
    %991 = vmatprep.subr.mxu0 0.0
    %992 = vmatpush1.msra.mxu0 0.0
    %993 = vmatprep.subr.mxu0 0.0
    %994 = vmatpush1.msra.mxu0 0.0
    %995 = vmatprep.subr.mxu0 0.0
    %996 = vmatpush1.msra.mxu0 0.0
    %997 = vmatprep.subr.mxu0 0.0
    %998 = vmatpush1.msra.mxu0 0.0
    %999 = vmatprep.subr.mxu0 0.0
    %1000 = vmatpush1.msra.mxu0 0.0
    %1001 = vmatprep.subr.mxu0 0.0
    %1002 = vmatpush1.msra.mxu0 0.0
    %1003 = vmatprep.subr.mxu0 0.0
    %1004 = vmatpush1.msra.mxu0 0.0
    %1005 = vmatprep.subr.mxu0 0.0
    %1006 = vmatpush1.msra.mxu0 0.0
    %1007 = vmatprep.subr.mxu0 0.0
    %1008 = vmatpush1.msra.mxu0 0.0
    %1009 = vmatprep.subr.mxu0 0.0
    %1010 = vmatpush1.msra.mxu0 0.0
    %1011 = vmatprep.subr.mxu0 0.0
    %1012 = vmatpush1.msra.mxu0 0.0
    %1013 = vmatprep.subr.mxu0 0.0
    %1014 = vmatpush1.msra.mxu0 0.0
    %1015 = vmatprep.subr.mxu0 0.0
    %1016 = vmatpush1.msra.mxu0 0.0
    %1017 = vmatprep.subr.mxu0 0.0
    %1018 = vmatpush1.msra.mxu0 0.0
    %1019 = vmatprep.subr.mxu0 0.0
    %1020 = vmatpush1.msra.mxu0 0.0
    %1021 = vmatprep.subr.mxu0 0.0
    %1022 = vmatpush1.msra.mxu0 0.0
    %1023 = vmatprep.subr.mxu0 0.0
    %1024 = vmatpush1.msra.mxu0 0.0
    %1025 = vmatprep.subr.mxu0 0.0
    %1026 = vmatpush1.msra.mxu0 0.0
    %1027 = vmatprep.subr.mxu0 0.0
    %1028 = vmatpush1.msra.mxu0 0.0
    %1029 = vmatprep.subr.mxu0 0.0
    %1030 = vmatpush1.msra.mxu0 0.0
    %1031 = vmatprep.subr.mxu0 0.0
    %1032 = vmatpush1.msra.mxu0 0.0
    %1033 = vmatprep.subr.mxu0 0.0
    %1034 = vmatpush1.msra.mxu0 0.0
    %1035 = vmatprep.subr.mxu0 0.0
    %1036 = vmatpush1.msra.mxu0 0.0
    %1037 = vmatprep.subr.mxu0 0.0
    %1038 = vmatpush1.msra.mxu0 0.0
    %1039 = vmatprep.mubr.f32.mxu0 0.0
    %1040 = vmatmul.mubr.f32.gmra.mrb[0].mxu0 %v971
    %v1041 = vpop.f32.mrb[0].mxu0
    %v1042 = vadd.f32 0.0, %v1041
    %v1043 = vpop.f32.mrb[0].mxu0
    %1044 = vdwg.mxu0
    %1045 = vrot.lane.b32.xlu0 %v724, 78
    %v1046 = vpop.permute.xlu0 %1045
    %1047 = vrot.lane.b32.xlu0 %v725, 78
    %v1048 = vpop.permute.xlu0 %1047
    %v1051 = vsel %vm888, %v803, 0
    %v1053 = vsel %vm892, %v1048, 0
    %1055 = vmatprep.subr.mxu0 0.0
    %1056 = vmatpush1.msra.mxu0 %v1046
    %1057 = vmatprep.subr.mxu0 0.0
    %1058 = vmatpush1.msra.mxu0 %v1053
    %1059 = vmatprep.subr.mxu0 0.0
    %1060 = vmatpush1.msra.mxu0 0.0
    %1061 = vmatprep.subr.mxu0 0.0
    %1062 = vmatpush1.msra.mxu0 0.0
    %1063 = vmatprep.subr.mxu0 0.0
    %1064 = vmatpush1.msra.mxu0 0.0
    %1065 = vmatprep.subr.mxu0 0.0
    %1066 = vmatpush1.msra.mxu0 0.0
    %1067 = vmatprep.subr.mxu0 0.0
    %1068 = vmatpush1.msra.mxu0 0.0
    %1069 = vmatprep.subr.mxu0 0.0
    %1070 = vmatpush1.msra.mxu0 0.0
    %1071 = vmatprep.subr.mxu0 0.0
    %1072 = vmatpush1.msra.mxu0 0.0
    %1073 = vmatprep.subr.mxu0 0.0
    %1074 = vmatpush1.msra.mxu0 0.0
    %1075 = vmatprep.subr.mxu0 0.0
    %1076 = vmatpush1.msra.mxu0 0.0
    %1077 = vmatprep.subr.mxu0 0.0
    %1078 = vmatpush1.msra.mxu0 0.0
    %1079 = vmatprep.subr.mxu0 0.0
    %1080 = vmatpush1.msra.mxu0 0.0
    %1081 = vmatprep.subr.mxu0 0.0
    %1082 = vmatpush1.msra.mxu0 0.0
    %1083 = vmatprep.subr.mxu0 0.0
    %1084 = vmatpush1.msra.mxu0 0.0
    %1085 = vmatprep.subr.mxu0 0.0
    %1086 = vmatpush1.msra.mxu0 0.0
    %1087 = vmatprep.subr.mxu0 0.0
    %1088 = vmatpush1.msra.mxu0 0.0
    %1089 = vmatprep.subr.mxu0 0.0
    %1090 = vmatpush1.msra.mxu0 0.0
    %1091 = vmatprep.subr.mxu0 0.0
    %1092 = vmatpush1.msra.mxu0 0.0
    %1093 = vmatprep.subr.mxu0 0.0
    %1094 = vmatpush1.msra.mxu0 0.0
    %1095 = vmatprep.subr.mxu0 0.0
    %1096 = vmatpush1.msra.mxu0 0.0
    %1097 = vmatprep.subr.mxu0 0.0
    %1098 = vmatpush1.msra.mxu0 0.0
    %1099 = vmatprep.subr.mxu0 0.0
    %1100 = vmatpush1.msra.mxu0 0.0
    %1101 = vmatprep.subr.mxu0 0.0
    %1102 = vmatpush1.msra.mxu0 0.0
    %1103 = vmatprep.subr.mxu0 0.0
    %1104 = vmatpush1.msra.mxu0 0.0
    %1105 = vmatprep.subr.mxu0 0.0
    %1106 = vmatpush1.msra.mxu0 0.0
    %1107 = vmatprep.subr.mxu0 0.0
    %1108 = vmatpush1.msra.mxu0 0.0
    %1109 = vmatprep.subr.mxu0 0.0
    %1110 = vmatpush1.msra.mxu0 0.0
    %1111 = vmatprep.subr.mxu0 0.0
    %1112 = vmatpush1.msra.mxu0 0.0
    %1113 = vmatprep.subr.mxu0 0.0
    %1114 = vmatpush1.msra.mxu0 0.0
    %1115 = vmatprep.subr.mxu0 0.0
    %1116 = vmatpush1.msra.mxu0 0.0
    %1117 = vmatprep.subr.mxu0 0.0
    %1118 = vmatpush1.msra.mxu0 0.0
    %1119 = vmatprep.mubr.f32.mxu0 0.0
    %1120 = vmatmul.mubr.f32.gmra.mrb[0].mxu0 %v1051
    %v1121 = vpop.f32.mrb[0].mxu0
    %v1122 = vadd.f32 0.0, %v1121
    %v1123 = vpop.f32.mrb[0].mxu0
    %1124 = vdwg.mxu0
    %v1125 = vadd.f32 %v1042, %v1122
    %1126 = vrot.lane.b32.xlu0 %v562, 36
    %v1127 = vpop.permute.xlu0 %1126
    %v1129 = vadd.f32 %v1125, %v1127
    %v1130 = vxor.u32 %v1129, 2147483648
    %v1131 = vmul.f32 %v1130, 1.442695
    %v1132 = vpow.pop %v1131
    %v1133 = vadd.f32 %v1132, 1.0
    %v1134 = vrcp.pop %v1133
    %v1135 = vmul.f32 1.0, %v1134
    %1136 = vrot.lane.b32.xlu0 %v803, 10
    %v1137 = vpop.permute.xlu0 %1136
    %v1139 = vmul.f32 %v1135, %v1137
    %1141 = vrot.lane.b32.xlu0 %v1139, 118
    %v1142 = vpop.permute.xlu0 %1141
    %1143 = vrot.lane.b32.xlu0 %v724, 58
    %v1144 = vpop.permute.xlu0 %1143
    %1145 = vrot.lane.b32.xlu0 %v725, 58
    %v1146 = vpop.permute.xlu0 %1145
    %v1148 = vsel %vm888, %v1142, 0
    %v1150 = vsel %vm892, %v1146, 0
    %1152 = vmatprep.subr.mxu0 0.0
    %1153 = vmatpush1.msra.mxu0 %v1144
    %1154 = vmatprep.subr.mxu0 0.0
    %1155 = vmatpush1.msra.mxu0 %v1150
    %1156 = vmatprep.subr.mxu0 0.0
    %1157 = vmatpush1.msra.mxu0 0.0
    %1158 = vmatprep.subr.mxu0 0.0
    %1159 = vmatpush1.msra.mxu0 0.0
    %1160 = vmatprep.subr.mxu0 0.0
    %1161 = vmatpush1.msra.mxu0 0.0
    %1162 = vmatprep.subr.mxu0 0.0
    %1163 = vmatpush1.msra.mxu0 0.0
    %1164 = vmatprep.subr.mxu0 0.0
    %1165 = vmatpush1.msra.mxu0 0.0
    %1166 = vmatprep.subr.mxu0 0.0
    %1167 = vmatpush1.msra.mxu0 0.0
    %1168 = vmatprep.subr.mxu0 0.0
    %1169 = vmatpush1.msra.mxu0 0.0
    %1170 = vmatprep.subr.mxu0 0.0
    %1171 = vmatpush1.msra.mxu0 0.0
    %1172 = vmatprep.subr.mxu0 0.0
    %1173 = vmatpush1.msra.mxu0 0.0
    %1174 = vmatprep.subr.mxu0 0.0
    %1175 = vmatpush1.msra.mxu0 0.0
    %1176 = vmatprep.subr.mxu0 0.0
    %1177 = vmatpush1.msra.mxu0 0.0
    %1178 = vmatprep.subr.mxu0 0.0
    %1179 = vmatpush1.msra.mxu0 0.0
    %1180 = vmatprep.subr.mxu0 0.0
    %1181 = vmatpush1.msra.mxu0 0.0
    %1182 = vmatprep.subr.mxu0 0.0
    %1183 = vmatpush1.msra.mxu0 0.0
    %1184 = vmatprep.subr.mxu0 0.0
    %1185 = vmatpush1.msra.mxu0 0.0
    %1186 = vmatprep.subr.mxu0 0.0
    %1187 = vmatpush1.msra.mxu0 0.0
    %1188 = vmatprep.subr.mxu0 0.0
    %1189 = vmatpush1.msra.mxu0 0.0
    %1190 = vmatprep.subr.mxu0 0.0
    %1191 = vmatpush1.msra.mxu0 0.0
    %1192 = vmatprep.subr.mxu0 0.0
    %1193 = vmatpush1.msra.mxu0 0.0
    %1194 = vmatprep.subr.mxu0 0.0
    %1195 = vmatpush1.msra.mxu0 0.0
    %1196 = vmatprep.subr.mxu0 0.0
    %1197 = vmatpush1.msra.mxu0 0.0
    %1198 = vmatprep.subr.mxu0 0.0
    %1199 = vmatpush1.msra.mxu0 0.0
    %1200 = vmatprep.subr.mxu0 0.0
    %1201 = vmatpush1.msra.mxu0 0.0
    %1202 = vmatprep.subr.mxu0 0.0
    %1203 = vmatpush1.msra.mxu0 0.0
    %1204 = vmatprep.subr.mxu0 0.0
    %1205 = vmatpush1.msra.mxu0 0.0
    %1206 = vmatprep.subr.mxu0 0.0
    %1207 = vmatpush1.msra.mxu0 0.0
    %1208 = vmatprep.subr.mxu0 0.0
    %1209 = vmatpush1.msra.mxu0 0.0
    %1210 = vmatprep.subr.mxu0 0.0
    %1211 = vmatpush1.msra.mxu0 0.0
    %1212 = vmatprep.subr.mxu0 0.0
    %1213 = vmatpush1.msra.mxu0 0.0
    %1214 = vmatprep.subr.mxu0 0.0
    %1215 = vmatpush1.msra.mxu0 0.0
    %1216 = vmatprep.mubr.f32.mxu0 0.0
    %1217 = vmatmul.mubr.f32.gmra.mrb[0].mxu0 %v1148
    %v1218 = vpop.f32.mrb[0].mxu0
    %v1219 = vadd.f32 0.0, %v1218
    %v1220 = vpop.f32.mrb[0].mxu0
    %1221 = vdwg.mxu0
    %1223 = vrot.lane.b32.xlu0 %v1219, 20
    %v1224 = vpop.permute.xlu0 %1223
    %v1226 = vadd.f32 %v1042, %v1224
    %v1227 = vadd.f32 %v1226, %v1127
    %v1228 = vtanh.pop %v1227
    %v1229 = vsub.f32 1.0, %v1135
    %v1230 = vmul.f32 %v1229, %v803
    %1232 = vrot.lane.b32.xlu0 %v1228, 108
    %v1233 = vpop.permute.xlu0 %1232
    %v1235 = vmul.f32 %v1135, %v1233
    %v1236 = vadd.f32 %v1230, %v1235
    %v1237 = vlaneseq
    %v1238 = vshrl.u32 %v1237, 7
    %v1239 = vsub.s32 1, %v1238
    %v1240 = vrot.slane %v548, %v1239
    %1241 = vrot.lane.b32.xlu0 %v724, 48
    %v1242 = vpop.permute.xlu0 %1241
    %1243 = vrot.lane.b32.xlu0 %v725, 48
    %v1244 = vpop.permute.xlu0 %1243
    %1246 = vrot.lane.b32.xlu0 %v562, 6
    %v1247 = vpop.permute.xlu0 %1246
    %1248 = vrot.lane.b32.xlu0 %v1240, 6
    %v1249 = vpop.permute.xlu0 %1248
    %vm1250 = vcmask 48128
    %v1251 = vsel %vm1250, %v1247, %v1249
    %v1254 = vsel %vm888, %v1236, 0
    %v1256 = vsel %vm892, %v1244, 0
    %1258 = vmatprep.subr.mxu0 0.0
    %1259 = vmatpush1.msra.mxu0 %v1242
    %1260 = vmatprep.subr.mxu0 0.0
    %1261 = vmatpush1.msra.mxu0 %v1256
    %1262 = vmatprep.subr.mxu0 0.0
    %1263 = vmatpush1.msra.mxu0 0.0
    %1264 = vmatprep.subr.mxu0 0.0
    %1265 = vmatpush1.msra.mxu0 0.0
    %1266 = vmatprep.subr.mxu0 0.0
    %1267 = vmatpush1.msra.mxu0 0.0
    %1268 = vmatprep.subr.mxu0 0.0
    %1269 = vmatpush1.msra.mxu0 0.0
    %1270 = vmatprep.subr.mxu0 0.0
    %1271 = vmatpush1.msra.mxu0 0.0
    %1272 = vmatprep.subr.mxu0 0.0
    %1273 = vmatpush1.msra.mxu0 0.0
    %1274 = vmatprep.subr.mxu0 0.0
    %1275 = vmatpush1.msra.mxu0 0.0
    %1276 = vmatprep.subr.mxu0 0.0
    %1277 = vmatpush1.msra.mxu0 0.0
    %1278 = vmatprep.subr.mxu0 0.0
    %1279 = vmatpush1.msra.mxu0 0.0
    %1280 = vmatprep.subr.mxu0 0.0
    %1281 = vmatpush1.msra.mxu0 0.0
    %1282 = vmatprep.subr.mxu0 0.0
    %1283 = vmatpush1.msra.mxu0 0.0
    %1284 = vmatprep.subr.mxu0 0.0
    %1285 = vmatpush1.msra.mxu0 0.0
    %1286 = vmatprep.subr.mxu0 0.0
    %1287 = vmatpush1.msra.mxu0 0.0
    %1288 = vmatprep.subr.mxu0 0.0
    %1289 = vmatpush1.msra.mxu0 0.0
    %1290 = vmatprep.subr.mxu0 0.0
    %1291 = vmatpush1.msra.mxu0 0.0
    %1292 = vmatprep.subr.mxu0 0.0
    %1293 = vmatpush1.msra.mxu0 0.0
    %1294 = vmatprep.subr.mxu0 0.0
    %1295 = vmatpush1.msra.mxu0 0.0
    %1296 = vmatprep.subr.mxu0 0.0
    %1297 = vmatpush1.msra.mxu0 0.0
    %1298 = vmatprep.subr.mxu0 0.0
    %1299 = vmatpush1.msra.mxu0 0.0
    %1300 = vmatprep.subr.mxu0 0.0
    %1301 = vmatpush1.msra.mxu0 0.0
    %1302 = vmatprep.subr.mxu0 0.0
    %1303 = vmatpush1.msra.mxu0 0.0
    %1304 = vmatprep.subr.mxu0 0.0
    %1305 = vmatpush1.msra.mxu0 0.0
    %1306 = vmatprep.subr.mxu0 0.0
    %1307 = vmatpush1.msra.mxu0 0.0
    %1308 = vmatprep.subr.mxu0 0.0
    %1309 = vmatpush1.msra.mxu0 0.0
    %1310 = vmatprep.subr.mxu0 0.0
    %1311 = vmatpush1.msra.mxu0 0.0
    %1312 = vmatprep.subr.mxu0 0.0
    %1313 = vmatpush1.msra.mxu0 0.0
    %1314 = vmatprep.subr.mxu0 0.0
    %1315 = vmatpush1.msra.mxu0 0.0
    %1316 = vmatprep.subr.mxu0 0.0
    %1317 = vmatpush1.msra.mxu0 0.0
    %1318 = vmatprep.subr.mxu0 0.0
    %1319 = vmatpush1.msra.mxu0 0.0
    %1320 = vmatprep.subr.mxu0 0.0
    %1321 = vmatpush1.msra.mxu0 0.0
    %1322 = vmatprep.mubr.f32.mxu0 0.0
    %1323 = vmatmul.mubr.f32.gmra.mrb[0].mxu0 %v1254
    %v1324 = vpop.f32.mrb[0].mxu0
    %v1325 = vadd.f32 %v1251, %v1324
    %v1326 = vpop.f32.mrb[0].mxu0
    %1327 = vdwg.mxu0
    %v1328 = vadd.f32 %v721, %v1325
    %v1329 = vsel %vm729, %v1328, -inf
    %1330 = vmax.xlane.f32.xlu0 %v1329
    %v1331 = vpop.xlane.xlu0 %1330
    %v1332 = vsub.f32 %v1328, %v1331
    %v1333 = vmul.f32 %v1332, 1.442695
    %v1334 = vpow.pop %v1333
    %v1335 = vsel %vm729, %v1334, 0.0
    %1336 = vadd.xlane.f32.xlu0 %v1335
    %v1337 = vpop.xlane.xlu0 %1336
    %v1338 = vrcp.pop %v1337
    %v1339 = vmul.f32 %v1334, %v1338
    %1340 = vst.msk [vmem:[#allocation3] sm:$0xff] %vm729, %v1339
    // Predicated region
    $region34: #{predicate_model_forward.1} parent=1 // pred_check
      _
    $region35: #{predicate_model_forward.1} parent=1 // pred_check_branch
      %1342 = sbr.rel (0) target = $region37
    $region36: #{predicate_model_forward.1} parent=1 // pred_region
      %s1344 = ssub.s32 128, 128
      %1345 = vsyncadd [#allocation4], %s1344
      %s1347 = sshll.u32 [#allocation3], 4
      %s1348 = int_to_ptr.vmem [resolvable:$true] %s1347
      %1350 = dma.vmem_to_hbm [thread:$0]  %s1348, 128, %s8, [#allocation4]
    $region37: #{predicate_model_forward.1} parent=1 // pred_fallthru
      _
    // Predicated region
    $region38: #{predicate_model_forward.1} parent=1 // pred_check
      _
    $region39: #{predicate_model_forward.1} parent=1 // pred_check_branch
      %1352 = sbr.rel (0) target = $region41
    $region40: #{predicate_model_forward.1} parent=1 // pred_region
      %1353 = dma.done [#allocation4], 128
    $region41: #{predicate_model_forward.1} parent=1 // pred_fallthru
      _
    %1354 = vsyncpa [#allocation4], 1

</llo_original>
